<compile_context>
chip_gen: v6e
topology: v6e:2x2x1
jax: 0.10.0
libtpu: 0.0.40
codegen_flags: <defaults>
</compile_context>

<pallas_src>
import functools
import math

import jax
import jax.numpy as jnp
from jax.experimental import pallas as pl
from jax.experimental.pallas import tpu as pltpu

INPUT_DIM = 16
HIDDEN_DIM = 512
OUTPUT_DIM = 1024
TM_MAX = 512        # default batch-tile cap
TM_MAX_LARGE = 1024  # used for very large batches


def _round_up(n, m):
    return ((n + m - 1) // m) * m


def _tensorcores_per_chip():
    """Best-effort detection of multi-TensorCore chips (v7x). Falls back to 1 (v5e/v6e)."""
    try:
        kind = jax.devices()[0].device_kind.lower()
    except Exception:
        return 1
    return 2 if ("v7" in kind or "7x" in kind) else 1


def _choose_tm(batch, num_cores):
    """Adaptive batch tile: multiple of 8, large enough to amortize pipeline overhead,
    small enough that every TensorCore gets at least one grid step."""
    tm_max = TM_MAX_LARGE if batch >= 2 * TM_MAX_LARGE * max(num_cores, 1) else TM_MAX
    tm = min(_round_up(batch, 8), tm_max)
    if num_cores > 1:
        tm = min(tm, max(8, _round_up(-(-batch // num_cores), 8)))
    return tm


def _hand_encoder_kernel(x_ref, w1_ref, b1_ref, w2_ref, b2_ref, o_ref):
    # x_ref: (tm, 16) f32, w1_ref: (16, 512) bf16, b1_ref: (1, 512) f32,
    # w2_ref: (512, 1024) bf16, b2_ref: (1, 1024) f32, o_ref: (tm, 1024) out_dtype.
    # Activations kept in f32 (MXU has slack in this memory-bound regime); weights are bf16.
    x = x_ref[...]
    h = jnp.dot(x, w1_ref[...].astype(jnp.float32),
                preferred_element_type=jnp.float32)
    h = jnp.maximum(h + b1_ref[...], 0.0)            # bias + ReLU in f32 (VPU)
    out = jnp.dot(h, w2_ref[...].astype(jnp.float32),
                  preferred_element_type=jnp.float32)
    out = jnp.maximum(out + b2_ref[...], 0.0)         # bias + ReLU in f32 (VPU)
    o_ref[...] = out.astype(o_ref.dtype)


def hand_encoder_forward(x, w1, b1, w2, b2, *, out_dtype=jnp.float32):
    """x: [B, 16] float32 -> [B, 1024] out_dtype (f32 by default, bf16 optional).

    w1: [16, 512] bf16, b1: [1, 512] f32, w2: [512, 1024] bf16, b2: [1, 1024] f32.
    """
    B = x.shape[0]
    num_cores = _tensorcores_per_chip()
    tm = _choose_tm(B, num_cores)
    grid = pl.cdiv(B, tm)  # ragged last block handled by Pallas (masked writes) -- no pad/slice

    out_bytes = jnp.dtype(out_dtype).itemsize
    flops = 2 * B * (INPUT_DIM * HIDDEN_DIM + HIDDEN_DIM * OUTPUT_DIM)
    bytes_accessed = (
        B * INPUT_DIM * x.dtype.itemsize           # x
        + B * OUTPUT_DIM * out_bytes               # out
        + INPUT_DIM * HIDDEN_DIM * w1.dtype.itemsize
        + HIDDEN_DIM * OUTPUT_DIM * w2.dtype.itemsize
        + HIDDEN_DIM * 4 + OUTPUT_DIM * 4          # biases (f32)
    )

    # Explicit VMEM budget (2x headroom): double-buffered x/out tiles + resident weights
    # (w2 also upcast to f32 inside the kernel) + f32 intermediates (h, pre-cast out).
    tile_vmem = (
        2 * tm * INPUT_DIM * 4
        + 2 * tm * OUTPUT_DIM * out_bytes
        + tm * HIDDEN_DIM * 4
        + tm * OUTPUT_DIM * 4
        + INPUT_DIM * HIDDEN_DIM * 2
        + HIDDEN_DIM * OUTPUT_DIM * (2 + 4)
        + (HIDDEN_DIM + OUTPUT_DIM) * 4
    )
    vmem_limit = int(min(48 << 20, max(16 << 20, 2 * tile_vmem)))

    # On multi-TC chips (v7x) use CORE_PARALLEL so the batch grid is truly sharded across cores;
    # on 1-TC chips "parallel" is sufficient (near-neutral vs "arbitrary").
    dim_sem = (pltpu.CORE_PARALLEL,) if num_cores > 1 else ("parallel",)

    out = pl.pallas_call(
        _hand_encoder_kernel,
        out_shape=jax.ShapeDtypeStruct((B, OUTPUT_DIM), out_dtype),
        grid_spec=pl.GridSpec(
            grid=(grid,),
            in_specs=[
                pl.BlockSpec((tm, INPUT_DIM), lambda i: (i, 0)),           # x tile
                pl.BlockSpec((INPUT_DIM, HIDDEN_DIM), lambda i: (0, 0),
                             pipeline_mode=pl.Buffered(1)),                # W1 (resident)
                pl.BlockSpec((1, HIDDEN_DIM), lambda i: (0, 0),
                             pipeline_mode=pl.Buffered(1)),                # b1 (resident)
                pl.BlockSpec((HIDDEN_DIM, OUTPUT_DIM), lambda i: (0, 0),
                             pipeline_mode=pl.Buffered(1)),                # W2 (resident)
                pl.BlockSpec((1, OUTPUT_DIM), lambda i: (0, 0),
                             pipeline_mode=pl.Buffered(1)),                # b2 (resident)
            ],
            out_specs=pl.BlockSpec((tm, OUTPUT_DIM), lambda i: (i, 0)),
        ),
        compiler_params=pltpu.CompilerParams(
            dimension_semantics=dim_sem,
            vmem_limit_bytes=vmem_limit,
        ),
        cost_estimate=pl.CostEstimate(
            flops=flops, transcendentals=0, bytes_accessed=bytes_accessed
        ),
    )(x, w1, b1, w2, b2)

    return out


def init_hand_encoder_params(key):
    """xavier_uniform weights, zero biases (as in the PyTorch module).

    Weights are stored [in_dim, out_dim] (transpose of PyTorch's [out, in]) in bf16 for the MXU;
    xavier_uniform is symmetric in fan_in/fan_out so the distribution matches. Biases stay f32.
    """
    k1, k2 = jax.random.split(key)

    def xavier_uniform(k, fan_in, fan_out):
        bound = math.sqrt(6.0 / (fan_in + fan_out))
        return jax.random.uniform(
            k, (fan_in, fan_out), dtype=jnp.float32, minval=-bound, maxval=bound
        )

    w1 = xavier_uniform(k1, INPUT_DIM, HIDDEN_DIM).astype(jnp.bfloat16)
    b1 = jnp.zeros((1, HIDDEN_DIM), dtype=jnp.float32)
    w2 = xavier_uniform(k2, HIDDEN_DIM, OUTPUT_DIM).astype(jnp.bfloat16)
    b2 = jnp.zeros((1, OUTPUT_DIM), dtype=jnp.float32)
    return w1, b1, w2, b2


def _reference_forward(x, w1, b1, w2, b2):
    # f32 reference (bf16-stored weights upcast to f32).
    h = jnp.maximum(x @ w1.astype(jnp.float32) + b1, 0.0)
    return jnp.maximum(h @ w2.astype(jnp.float32) + b2, 0.0)


if __name__ == "__main__":
    key = jax.random.PRNGKey(0)
    k_param, k_x = jax.random.split(key)

    w1, b1, w2, b2 = init_hand_encoder_params(k_param)

    # hand_tracking: [batch_size * num_cameras, 16]
    batch = 8
    x = jax.random.normal(k_x, (batch, INPUT_DIM), dtype=jnp.float32)

    # Default f32 output (matches the PyTorch forward).
    fwd = jax.jit(hand_encoder_forward)
    out = jax.block_until_ready(fwd(x, w1, b1, w2, b2))
    assert out.shape == (batch, OUTPUT_DIM), out.shape
    assert out.dtype == jnp.float32, out.dtype
    ref = _reference_forward(x, w1, b1, w2, b2)
    assert jnp.allclose(out, ref, atol=2e-2, rtol=2e-2), "mismatch vs reference (f32 out)"

    # Optional bf16 output (halves HBM writeback -- the dominant traffic for large batches).
    fwd_bf16 = jax.jit(functools.partial(hand_encoder_forward, out_dtype=jnp.bfloat16))
    out_bf16 = jax.block_until_ready(fwd_bf16(x, w1, b1, w2, b2))
    assert out_bf16.shape == (batch, OUTPUT_DIM), out_bf16.shape
    assert out_bf16.dtype == jnp.bfloat16, out_bf16.dtype
    assert jnp.allclose(out_bf16.astype(jnp.float32), ref, atol=5e-2, rtol=5e-2), \
        "mismatch vs reference (bf16 out)"

    print("KERNEL_OK")
</pallas_src>

<mosaic_0001>
module attributes {stable_mosaic.version = 11 : i64} {
  func.func @_hand_encoder_kernel(%arg0: i32, %arg1: memref<8x16xf32, #tpu.memory_space<vmem>>, %arg2: memref<16x512xbf16, #tpu.memory_space<vmem>>, %arg3: memref<1x512xf32, #tpu.memory_space<vmem>>, %arg4: memref<512x1024xbf16, #tpu.memory_space<vmem>>, %arg5: memref<1x1024xf32, #tpu.memory_space<vmem>>, %arg6: memref<8x1024xf32, #tpu.memory_space<vmem>>) attributes {dimension_semantics = [#tpu.dimension_semantics<parallel>], iteration_bounds = array<i64: 1>, scalar_prefetch = 0 : i64, scratch_operands = 0 : i64, tpu.core_type = #tpu.core_type<tc>, window_params = [{transform_indices = @transform_0, window_bounds = array<i64: 8, 16>}, {pipeline_mode = #tpu.pipeline_mode<synchronous>, transform_indices = @transform_1, window_bounds = array<i64: 16, 512>}, {pipeline_mode = #tpu.pipeline_mode<synchronous>, transform_indices = @transform_2, window_bounds = array<i64: 1, 512>}, {pipeline_mode = #tpu.pipeline_mode<synchronous>, transform_indices = @transform_3, window_bounds = array<i64: 512, 1024>}, {pipeline_mode = #tpu.pipeline_mode<synchronous>, transform_indices = @transform_4, window_bounds = array<i64: 1, 1024>}, {transform_indices = @transform_5, window_bounds = array<i64: 8, 1024>}]} {
    %c0 = arith.constant 0 : index
    %c0_0 = arith.constant 0 : index
    %0 = vector.load %arg1[%c0, %c0_0] : memref<8x16xf32, #tpu.memory_space<vmem>>, vector<8x16xf32>
    %c0_1 = arith.constant 0 : index
    %c0_2 = arith.constant 0 : index
    %1 = vector.load %arg2[%c0_1, %c0_2] : memref<16x512xbf16, #tpu.memory_space<vmem>>, vector<16x512xbf16>
    %2 = arith.extf %1 : vector<16x512xbf16> to vector<16x512xf32>
    %cst = arith.constant dense<0.000000e+00> : vector<8x512xf32>
    %3 = tpu.matmul %0, %2, %cst {dimension_numbers = #tpu.dot_dimension_numbers<[1], [0], [0], [1], [0, 0, 1, 1], [], []>} : vector<8x16xf32>, vector<16x512xf32>, vector<8x512xf32> -> vector<8x512xf32>
    %c0_3 = arith.constant 0 : index
    %c0_4 = arith.constant 0 : index
    %4 = vector.load %arg3[%c0_3, %c0_4] : memref<1x512xf32, #tpu.memory_space<vmem>>, vector<1x512xf32>
    %5 = vector.broadcast %4 : vector<1x512xf32> to vector<8x512xf32>
    %6 = arith.addf %3, %5 : vector<8x512xf32>
    %cst_5 = arith.constant 0.000000e+00 : f32
    %7 = vector.broadcast %cst_5 : f32 to vector<8x512xf32>
    %8 = arith.maximumf %6, %7 : vector<8x512xf32>
    %c0_6 = arith.constant 0 : index
    %c0_7 = arith.constant 0 : index
    %9 = vector.load %arg4[%c0_6, %c0_7] : memref<512x1024xbf16, #tpu.memory_space<vmem>>, vector<512x1024xbf16>
    %10 = arith.extf %9 : vector<512x1024xbf16> to vector<512x1024xf32>
    %cst_8 = arith.constant dense<0.000000e+00> : vector<8x1024xf32>
    %11 = tpu.matmul %8, %10, %cst_8 {dimension_numbers = #tpu.dot_dimension_numbers<[1], [0], [0], [1], [0, 0, 1, 1], [], []>} : vector<8x512xf32>, vector<512x1024xf32>, vector<8x1024xf32> -> vector<8x1024xf32>
    %c0_9 = arith.constant 0 : index
    %c0_10 = arith.constant 0 : index
    %12 = vector.load %arg5[%c0_9, %c0_10] : memref<1x1024xf32, #tpu.memory_space<vmem>>, vector<1x1024xf32>
    %13 = vector.broadcast %12 : vector<1x1024xf32> to vector<8x1024xf32>
    %14 = arith.addf %11, %13 : vector<8x1024xf32>
    %cst_11 = arith.constant 0.000000e+00 : f32
    %15 = vector.broadcast %cst_11 : f32 to vector<8x1024xf32>
    %16 = arith.maximumf %14, %15 : vector<8x1024xf32>
    %c0_12 = arith.constant 0 : index
    %c0_13 = arith.constant 0 : index
    %17 = vector.load %arg6[%c0_12, %c0_13] : memref<8x1024xf32, #tpu.memory_space<vmem>>, vector<8x1024xf32>
    tpu.vector_store %arg6[%c0_12, %c0_13], %16 {strides = array<i32>} : memref<8x1024xf32, #tpu.memory_space<vmem>>, vector<8x1024xf32>,
    return
  }
  func.func @transform_0(%arg0: i32) -> (i32, i32) {
    %c0_i32 = arith.constant 0 : i32
    %c0_i32_0 = arith.constant 0 : i32
    return %arg0, %c0_i32 : i32, i32
  }
  func.func @transform_1(%arg0: i32) -> (i32, i32) {
    %c0_i32 = arith.constant 0 : i32
    %c0_i32_0 = arith.constant 0 : i32
    %c0_i32_1 = arith.constant 0 : i32
    return %c0_i32, %c0_i32_0 : i32, i32
  }
  func.func @transform_2(%arg0: i32) -> (i32, i32) {
    %c0_i32 = arith.constant 0 : i32
    %c0_i32_0 = arith.constant 0 : i32
    %c0_i32_1 = arith.constant 0 : i32
    return %c0_i32, %c0_i32_0 : i32, i32
  }
  func.func @transform_3(%arg0: i32) -> (i32, i32) {
    %c0_i32 = arith.constant 0 : i32
    %c0_i32_0 = arith.constant 0 : i32
    %c0_i32_1 = arith.constant 0 : i32
    return %c0_i32, %c0_i32_0 : i32, i32
  }
  func.func @transform_4(%arg0: i32) -> (i32, i32) {
    %c0_i32 = arith.constant 0 : i32
    %c0_i32_0 = arith.constant 0 : i32
    %c0_i32_1 = arith.constant 0 : i32
    return %c0_i32, %c0_i32_0 : i32, i32
  }
  func.func @transform_5(%arg0: i32) -> (i32, i32) {
    %c0_i32 = arith.constant 0 : i32
    %c0_i32_0 = arith.constant 0 : i32
    return %arg0, %c0_i32 : i32, i32
  }
}

</mosaic_0001>

<llo_original>
// kernel: hand_encoder_forward.1
$region0: #{hand_encoder_forward.1}
  #allocation0 [shape = 'u32[]', space=smem, size = 0x4, offset = 0x4, fixed_abs, tag = 'smem constant byte address 0x4 - core index']
  #allocation1 [shape = 'u32[144,128]{1,0:T(1,128)}', space=vmem, size = 0x12000, scoped, tag = 'internal scratch']
  %s0 = inlined_call_operand.hbm [shape: f32[8,16], index: 0, kind: input, shape index: {}]
  %s1 = inlined_call_operand.hbm [shape: bf16[16,512], index: 1, kind: input, shape index: {}]
  %s2 = inlined_call_operand.hbm [shape: f32[1,512], index: 2, kind: input, shape index: {}]
  %s3 = inlined_call_operand.hbm [shape: bf16[512,1024], index: 3, kind: input, shape index: {}]
  %s4 = inlined_call_operand.hbm [shape: f32[1,1024], index: 4, kind: input, shape index: {}]
  %s5 = inlined_call_operand.hbm [shape: f32[8,1024], index: 5, kind: output, shape index: {}]
  %s6 = sld [smem:[#allocation0]]
  $region50: #{hand_encoder_forward.1} parent=0
    _
  %s8 = ssub.s32 1, %s6
  %s9 = scalar_select 0, %s8, %s6
  $region1: #{hand_encoder_forward.1} parent=0
    #allocation2 [shape = 'u8[4096]{0}', space=vmem, size = 0x1000, scoped, tag = 'input window, operand 0, single buffered']
    #allocation3 [shape = 's32[1]{0}', space=sflag, size = 0x4, scoped, tag = 'scoped memory for hand_encoder_forward.1']
    #allocation4 [shape = 's32[1]{0}', space=sflag, size = 0x4, scoped, tag = 'scoped memory for hand_encoder_forward.1']
    #allocation5 [shape = 'u8[16384]{0}', space=vmem, size = 0x4000, scoped, tag = 'input window, operand 1, single buffered']
    #allocation6 [shape = 's32[1]{0}', space=sflag, size = 0x4, scoped, tag = 'scoped memory for hand_encoder_forward.1']
    #allocation7 [shape = 'u8[2048]{0}', space=vmem, size = 0x800, scoped, tag = 'input window, operand 2, single buffered']
    #allocation8 [shape = 'u8[1048576]{0}', space=vmem, size = 0x100000, scoped, tag = 'input window, operand 3, single buffered']
    #allocation9 [shape = 's32[1]{0}', space=sflag, size = 0x4, scoped, tag = 'scoped memory for hand_encoder_forward.1']
    #allocation10 [shape = 'u8[4096]{0}', space=vmem, size = 0x1000, scoped, tag = 'input window, operand 4, single buffered']
    #allocation11 [shape = 'u8[32768]{0}', space=vmem, size = 0x8000, scoped, tag = 'output window, operand 0, single buffered']
    %10 = vsyncpa [#allocation3], 0
    %11 = vsyncpa [#allocation6], 0
    %12 = vsyncpa [#allocation9], 0
    %13 = vsyncpa [#allocation4], 0
    // Predicated region
    $region2: #{hand_encoder_forward.1} parent=1 // pred_check
      _
    $region3: #{hand_encoder_forward.1} parent=1 // pred_check_branch
      %15 = sbr.rel (0) target = $region5
    $region4: #{hand_encoder_forward.1} parent=1 // pred_region
      %s17 = ssub.s32 128, 128
      %18 = vsyncadd [#allocation3], %s17
      %s20 = sshll.u32 [#allocation2], 4
      %s21 = int_to_ptr.vmem [resolvable:$true] %s20
      %23 = dma.hbm_to_vmem [thread:$0]  %s0, 128, %s21, [#allocation3]
    $region5: #{hand_encoder_forward.1} parent=1 // pred_fallthru
      _
    // Predicated region
    $region6: #{hand_encoder_forward.1} parent=1 // pred_check
      _
    $region7: #{hand_encoder_forward.1} parent=1 // pred_check_branch
      %25 = sbr.rel (0) target = $region9
    $region8: #{hand_encoder_forward.1} parent=1 // pred_region
      %s27 = ssub.s32 512, 512
      %28 = vsyncadd [#allocation6], %s27
      %s29 = sshll.u32 [#allocation5], 4
      %s30 = int_to_ptr.vmem [resolvable:$true] %s29
      %35 = dma.hbm_to_vmem [thread:$0]  %s1, 512, %s30, [#allocation6], 256, 256, 16
    $region9: #{hand_encoder_forward.1} parent=1 // pred_fallthru
      _
    // Predicated region
    $region10: #{hand_encoder_forward.1} parent=1 // pred_check
      _
    $region11: #{hand_encoder_forward.1} parent=1 // pred_check_branch
      %37 = sbr.rel (0) target = $region13
    $region12: #{hand_encoder_forward.1} parent=1 // pred_region
      %s39 = ssub.s32 64, 64
      %40 = vsyncadd [#allocation6], %s39
      %s42 = sshll.u32 [#allocation7], 4
      %s43 = int_to_ptr.vmem [resolvable:$true] %s42
      %45 = dma.hbm_to_vmem [thread:$0]  %s2, 64, %s43, [#allocation6]
    $region13: #{hand_encoder_forward.1} parent=1 // pred_fallthru
      _
    // Predicated region
    $region14: #{hand_encoder_forward.1} parent=1 // pred_check
      _
    $region15: #{hand_encoder_forward.1} parent=1 // pred_check_branch
      %47 = sbr.rel (0) target = $region17
    $region16: #{hand_encoder_forward.1} parent=1 // pred_region
      %s49 = ssub.s32 32768, 32768
      %50 = vsyncadd [#allocation9], %s49
      %s51 = sshll.u32 [#allocation8], 4
      %s52 = int_to_ptr.vmem [resolvable:$true] %s51
      %57 = dma.hbm_to_vmem [thread:$0]  %s3, 32768, %s52, [#allocation9], 512, 512, 32
    $region17: #{hand_encoder_forward.1} parent=1 // pred_fallthru
      _
    // Predicated region
    $region18: #{hand_encoder_forward.1} parent=1 // pred_check
      _
    $region19: #{hand_encoder_forward.1} parent=1 // pred_check_branch
      %59 = sbr.rel (0) target = $region21
    $region20: #{hand_encoder_forward.1} parent=1 // pred_region
      %s61 = ssub.s32 128, 128
      %62 = vsyncadd [#allocation9], %s61
      %s64 = sshll.u32 [#allocation10], 4
      %s65 = int_to_ptr.vmem [resolvable:$true] %s64
      %67 = dma.hbm_to_vmem [thread:$0]  %s4, 128, %s65, [#allocation9]
    $region21: #{hand_encoder_forward.1} parent=1 // pred_fallthru
      _
    // Predicated region
    $region22: #{hand_encoder_forward.1} parent=1 // pred_check
      _
    $region23: #{hand_encoder_forward.1} parent=1 // pred_check_branch
      %69 = sbr.rel (0) target = $region25
    $region24: #{hand_encoder_forward.1} parent=1 // pred_region
      %70 = dma.done [#allocation3], 128
    $region25: #{hand_encoder_forward.1} parent=1 // pred_fallthru
      _
    // Predicated region
    $region26: #{hand_encoder_forward.1} parent=1 // pred_check
      _
    $region27: #{hand_encoder_forward.1} parent=1 // pred_check_branch
      %72 = sbr.rel (0) target = $region29
    $region28: #{hand_encoder_forward.1} parent=1 // pred_region
      %73 = dma.done [#allocation6], 512
    $region29: #{hand_encoder_forward.1} parent=1 // pred_fallthru
      _
    // Predicated region
    $region30: #{hand_encoder_forward.1} parent=1 // pred_check
      _
    $region31: #{hand_encoder_forward.1} parent=1 // pred_check_branch
      %75 = sbr.rel (0) target = $region33
    $region32: #{hand_encoder_forward.1} parent=1 // pred_region
      %76 = dma.done [#allocation6], 64
    $region33: #{hand_encoder_forward.1} parent=1 // pred_fallthru
      _
    // Predicated region
    $region34: #{hand_encoder_forward.1} parent=1 // pred_check
      _
    $region35: #{hand_encoder_forward.1} parent=1 // pred_check_branch
      %78 = sbr.rel (0) target = $region37
    $region36: #{hand_encoder_forward.1} parent=1 // pred_region
      %79 = dma.done [#allocation9], 32768
    $region37: #{hand_encoder_forward.1} parent=1 // pred_fallthru
      _
    // Predicated region
    $region38: #{hand_encoder_forward.1} parent=1 // pred_check
      _
    $region39: #{hand_encoder_forward.1} parent=1 // pred_check_branch
      %81 = sbr.rel (0) target = $region41
    $region40: #{hand_encoder_forward.1} parent=1 // pred_region
      %82 = dma.done [#allocation9], 128
    $region41: #{hand_encoder_forward.1} parent=1 // pred_fallthru
      _
    %v83 = vld [vmem:[#allocation2] sm:$0xff]
    %v84 = vld [vmem:[#allocation5] sm:$0xff]
    %v85 = vld [vmem:[#allocation5 + $0x8] sm:$0xff]
    %v86 = vld [vmem:[#allocation5 + $0x10] sm:$0xff]
    %v87 = vld [vmem:[#allocation5 + $0x18] sm:$0xff]
    %v88 = vunpack.c.l.bf16 %v84
    %v89 = vunpack.c.h.bf16 %v84
    %v90 = vunpack.c.l.bf16 %v85
    %v91 = vunpack.c.h.bf16 %v85
    %v92 = vunpack.c.l.bf16 %v86
    %v93 = vunpack.c.h.bf16 %v86
    %v94 = vunpack.c.l.bf16 %v87
    %v95 = vunpack.c.h.bf16 %v87
    %v96 = vld [vmem:[#allocation7] sm:$0xf]
    %v98 = vlaneseq
    %v99 = vshrl.u32 %v98, 7
    %v100 = vsub.s32 0, %v99
    %v101 = vrot.slane %v96, %v100
    %v102 = vlaneseq
    %v103 = vshrl.u32 %v102, 7
    %v104 = vsub.s32 1, %v103
    %v105 = vrot.slane %v96, %v104
    %v106 = vlaneseq
    %v107 = vshrl.u32 %v106, 7
    %v108 = vsub.s32 2, %v107
    %v109 = vrot.slane %v96, %v108
    %v110 = vlaneseq
    %v111 = vshrl.u32 %v110, 7
    %v112 = vsub.s32 3, %v111
    %v113 = vrot.slane %v96, %v112
    %vm118 = vcmask 130048
    %v120 = vsel %vm118, %v83, 0
    %122 = vmatprep.subr.mxu0 0.0
    %123 = vmatpush1.msra.mxu0 0.0
    %124 = vmatprep.subr.mxu0 0.0
    %125 = vmatpush1.msra.mxu0 0.0
    %126 = vmatprep.subr.mxu0 0.0
    %127 = vmatpush1.msra.mxu0 0.0
    %128 = vmatprep.subr.mxu0 0.0
    %129 = vmatpush1.msra.mxu0 0.0
    %130 = vmatprep.subr.mxu0 0.0
    %131 = vmatpush1.msra.mxu0 0.0
    %132 = vmatprep.subr.mxu0 0.0
    %133 = vmatpush1.msra.mxu0 0.0
    %134 = vmatprep.subr.mxu0 0.0
    %135 = vmatpush1.msra.mxu0 0.0
    %136 = vmatprep.subr.mxu0 0.0
    %137 = vmatpush1.msra.mxu0 0.0
    %138 = vmatprep.subr.mxu0 0.0
    %139 = vmatpush1.msra.mxu0 0.0
    %140 = vmatprep.subr.mxu0 0.0
    %141 = vmatpush1.msra.mxu0 0.0
    %142 = vmatprep.subr.mxu0 0.0
    %143 = vmatpush1.msra.mxu0 0.0
    %144 = vmatprep.subr.mxu0 0.0
    %145 = vmatpush1.msra.mxu0 0.0
    %146 = vmatprep.subr.mxu0 0.0
    %147 = vmatpush1.msra.mxu0 0.0
    %148 = vmatprep.subr.mxu0 0.0
    %149 = vmatpush1.msra.mxu0 0.0
    %150 = vmatprep.subr.mxu0 %v93
    %151 = vmatpush1.msra.mxu0 %v92
    %152 = vmatprep.subr.mxu0 %v89
    %153 = vmatpush1.msra.mxu0 %v88
    %154 = vmatprep.subr.mxu0 0.0
    %155 = vmatpush2.msra.mxu0 0.0
    %156 = vmatprep.subr.mxu0 0.0
    %157 = vmatpush2.msra.mxu0 0.0
    %158 = vmatprep.subr.mxu0 0.0
    %159 = vmatpush2.msra.mxu0 0.0
    %160 = vmatprep.subr.mxu0 0.0
    %161 = vmatpush2.msra.mxu0 0.0
    %162 = vmatprep.subr.mxu0 0.0
    %163 = vmatpush2.msra.mxu0 0.0
    %164 = vmatprep.subr.mxu0 0.0
    %165 = vmatpush2.msra.mxu0 0.0
    %166 = vmatprep.subr.mxu0 0.0
    %167 = vmatpush2.msra.mxu0 0.0
    %168 = vmatprep.subr.mxu0 0.0
    %169 = vmatpush2.msra.mxu0 0.0
    %170 = vmatprep.subr.mxu0 0.0
    %171 = vmatpush2.msra.mxu0 0.0
    %172 = vmatprep.subr.mxu0 0.0
    %173 = vmatpush2.msra.mxu0 0.0
    %174 = vmatprep.subr.mxu0 0.0
    %175 = vmatpush2.msra.mxu0 0.0
    %176 = vmatprep.subr.mxu0 0.0
    %177 = vmatpush2.msra.mxu0 0.0
    %178 = vmatprep.subr.mxu0 0.0
    %179 = vmatpush2.msra.mxu0 0.0
    %180 = vmatprep.subr.mxu0 0.0
    %181 = vmatpush2.msra.mxu0 0.0
    %182 = vmatprep.subr.mxu0 0.0
    %183 = vmatpush2.msra.mxu0 0.0
    %184 = vmatprep.subr.mxu0 0.0
    %185 = vmatpush2.msra.mxu0 0.0
    %186 = vmatprep.mubr.f32.mxu0 0.0
    %187 = vmatmul.mubr.f32.gmra.mxu0 %v120
    %v188 = vpop.f32.mrf.mxu0
    %v189 = vadd.f32 %v101, %v188
    %v190 = vpop.f32.mrf.mxu0
    %v191 = vadd.f32 %v105, %v190
    %192 = vdwg.mxu0
    %193 = vmatprep.subr.mxu0 0.0
    %194 = vmatpush1.msra.mxu0 0.0
    %195 = vmatprep.subr.mxu0 0.0
    %196 = vmatpush1.msra.mxu0 0.0
    %197 = vmatprep.subr.mxu0 0.0
    %198 = vmatpush1.msra.mxu0 0.0
    %199 = vmatprep.subr.mxu0 0.0
    %200 = vmatpush1.msra.mxu0 0.0
    %201 = vmatprep.subr.mxu0 0.0
    %202 = vmatpush1.msra.mxu0 0.0
    %203 = vmatprep.subr.mxu0 0.0
    %204 = vmatpush1.msra.mxu0 0.0
    %205 = vmatprep.subr.mxu0 0.0
    %206 = vmatpush1.msra.mxu0 0.0
    %207 = vmatprep.subr.mxu0 0.0
    %208 = vmatpush1.msra.mxu0 0.0
    %209 = vmatprep.subr.mxu0 0.0
    %210 = vmatpush1.msra.mxu0 0.0
    %211 = vmatprep.subr.mxu0 0.0
    %212 = vmatpush1.msra.mxu0 0.0
    %213 = vmatprep.subr.mxu0 0.0
    %214 = vmatpush1.msra.mxu0 0.0
    %215 = vmatprep.subr.mxu0 0.0
    %216 = vmatpush1.msra.mxu0 0.0
    %217 = vmatprep.subr.mxu0 0.0
    %218 = vmatpush1.msra.mxu0 0.0
    %219 = vmatprep.subr.mxu0 0.0
    %220 = vmatpush1.msra.mxu0 0.0
    %221 = vmatprep.subr.mxu0 %v95
    %222 = vmatpush1.msra.mxu0 %v94
    %223 = vmatprep.subr.mxu0 %v91
    %224 = vmatpush1.msra.mxu0 %v90
    %225 = vmatprep.subr.mxu0 0.0
    %226 = vmatpush2.msra.mxu0 0.0
    %227 = vmatprep.subr.mxu0 0.0
    %228 = vmatpush2.msra.mxu0 0.0
    %229 = vmatprep.subr.mxu0 0.0
    %230 = vmatpush2.msra.mxu0 0.0
    %231 = vmatprep.subr.mxu0 0.0
    %232 = vmatpush2.msra.mxu0 0.0
    %233 = vmatprep.subr.mxu0 0.0
    %234 = vmatpush2.msra.mxu0 0.0
    %235 = vmatprep.subr.mxu0 0.0
    %236 = vmatpush2.msra.mxu0 0.0
    %237 = vmatprep.subr.mxu0 0.0
    %238 = vmatpush2.msra.mxu0 0.0
    %239 = vmatprep.subr.mxu0 0.0
    %240 = vmatpush2.msra.mxu0 0.0
    %241 = vmatprep.subr.mxu0 0.0
    %242 = vmatpush2.msra.mxu0 0.0
    %243 = vmatprep.subr.mxu0 0.0
    %244 = vmatpush2.msra.mxu0 0.0
    %245 = vmatprep.subr.mxu0 0.0
    %246 = vmatpush2.msra.mxu0 0.0
    %247 = vmatprep.subr.mxu0 0.0
    %248 = vmatpush2.msra.mxu0 0.0
    %249 = vmatprep.subr.mxu0 0.0
    %250 = vmatpush2.msra.mxu0 0.0
    %251 = vmatprep.subr.mxu0 0.0
    %252 = vmatpush2.msra.mxu0 0.0
    %253 = vmatprep.subr.mxu0 0.0
    %254 = vmatpush2.msra.mxu0 0.0
    %255 = vmatprep.subr.mxu0 0.0
    %256 = vmatpush2.msra.mxu0 0.0
    %257 = vmatprep.mubr.f32.mxu0 0.0
    %258 = vmatmul.mubr.f32.gmra.mxu0 %v120
    %v259 = vpop.f32.mrf.mxu0
    %v260 = vadd.f32 %v109, %v259
    %v261 = vpop.f32.mrf.mxu0
    %v262 = vadd.f32 %v113, %v261
    %263 = vdwg.mxu0
    %v264 = vmax.f32 %v189, 0.0
    %v265 = vmax.f32 %v191, 0.0
    %v266 = vmax.f32 %v260, 0.0
    %v267 = vmax.f32 %v262, 0.0
    %v268 = vld [vmem:[#allocation8] sm:$0xff]
    %v269 = vld [vmem:[#allocation8 + $0x8] sm:$0xff]
    %v270 = vld [vmem:[#allocation8 + $0x10] sm:$0xff]
    %v271 = vld [vmem:[#allocation8 + $0x18] sm:$0xff]
    %v272 = vld [vmem:[#allocation8 + $0x20] sm:$0xff]
    %v273 = vld [vmem:[#allocation8 + $0x28] sm:$0xff]
    %v274 = vld [vmem:[#allocation8 + $0x30] sm:$0xff]
    %v275 = vld [vmem:[#allocation8 + $0x38] sm:$0xff]
    %v276 = vld [vmem:[#allocation8 + $0x40] sm:$0xff]
    %v277 = vld [vmem:[#allocation8 + $0x48] sm:$0xff]
    %v278 = vld [vmem:[#allocation8 + $0x50] sm:$0xff]
    %v279 = vld [vmem:[#allocation8 + $0x58] sm:$0xff]
    %v280 = vld [vmem:[#allocation8 + $0x60] sm:$0xff]
    %v281 = vld [vmem:[#allocation8 + $0x68] sm:$0xff]
    %v282 = vld [vmem:[#allocation8 + $0x70] sm:$0xff]
    %v283 = vld [vmem:[#allocation8 + $0x78] sm:$0xff]
    %v284 = vld [vmem:[#allocation8 + $0x80] sm:$0xff]
    %v285 = vld [vmem:[#allocation8 + $0x88] sm:$0xff]
    %v286 = vld [vmem:[#allocation8 + $0x90] sm:$0xff]
    %v287 = vld [vmem:[#allocation8 + $0x98] sm:$0xff]
    %v288 = vld [vmem:[#allocation8 + $0xa0] sm:$0xff]
    %v289 = vld [vmem:[#allocation8 + $0xa8] sm:$0xff]
    %v290 = vld [vmem:[#allocation8 + $0xb0] sm:$0xff]
    %v291 = vld [vmem:[#allocation8 + $0xb8] sm:$0xff]
    %v292 = vld [vmem:[#allocation8 + $0xc0] sm:$0xff]
    %v293 = vld [vmem:[#allocation8 + $0xc8] sm:$0xff]
    %v294 = vld [vmem:[#allocation8 + $0xd0] sm:$0xff]
    %v295 = vld [vmem:[#allocation8 + $0xd8] sm:$0xff]
    %v296 = vld [vmem:[#allocation8 + $0xe0] sm:$0xff]
    %v297 = vld [vmem:[#allocation8 + $0xe8] sm:$0xff]
    %v298 = vld [vmem:[#allocation8 + $0xf0] sm:$0xff]
    %v299 = vld [vmem:[#allocation8 + $0xf8] sm:$0xff]
    %v300 = vld [vmem:[#allocation8 + $0x100] sm:$0xff]
    %v301 = vld [vmem:[#allocation8 + $0x108] sm:$0xff]
    %v302 = vld [vmem:[#allocation8 + $0x110] sm:$0xff]
    %v303 = vld [vmem:[#allocation8 + $0x118] sm:$0xff]
    %v304 = vld [vmem:[#allocation8 + $0x120] sm:$0xff]
    %v305 = vld [vmem:[#allocation8 + $0x128] sm:$0xff]
    %v306 = vld [vmem:[#allocation8 + $0x130] sm:$0xff]
    %v307 = vld [vmem:[#allocation8 + $0x138] sm:$0xff]
    %v308 = vld [vmem:[#allocation8 + $0x140] sm:$0xff]
    %v309 = vld [vmem:[#allocation8 + $0x148] sm:$0xff]
    %v310 = vld [vmem:[#allocation8 + $0x150] sm:$0xff]
    %v311 = vld [vmem:[#allocation8 + $0x158] sm:$0xff]
    %v312 = vld [vmem:[#allocation8 + $0x160] sm:$0xff]
    %v313 = vld [vmem:[#allocation8 + $0x168] sm:$0xff]
    %v314 = vld [vmem:[#allocation8 + $0x170] sm:$0xff]
    %v315 = vld [vmem:[#allocation8 + $0x178] sm:$0xff]
    %v316 = vld [vmem:[#allocation8 + $0x180] sm:$0xff]
    %v317 = vld [vmem:[#allocation8 + $0x188] sm:$0xff]
    %v318 = vld [vmem:[#allocation8 + $0x190] sm:$0xff]
    %v319 = vld [vmem:[#allocation8 + $0x198] sm:$0xff]
    %v320 = vld [vmem:[#allocation8 + $0x1a0] sm:$0xff]
    %v321 = vld [vmem:[#allocation8 + $0x1a8] sm:$0xff]
    %v322 = vld [vmem:[#allocation8 + $0x1b0] sm:$0xff]
    %v323 = vld [vmem:[#allocation8 + $0x1b8] sm:$0xff]
    %v324 = vld [vmem:[#allocation8 + $0x1c0] sm:$0xff]
    %v325 = vld [vmem:[#allocation8 + $0x1c8] sm:$0xff]
    %v326 = vld [vmem:[#allocation8 + $0x1d0] sm:$0xff]
    %v327 = vld [vmem:[#allocation8 + $0x1d8] sm:$0xff]
    %v328 = vld [vmem:[#allocation8 + $0x1e0] sm:$0xff]
    %v329 = vld [vmem:[#allocation8 + $0x1e8] sm:$0xff]
    %v330 = vld [vmem:[#allocation8 + $0x1f0] sm:$0xff]
    %v331 = vld [vmem:[#allocation8 + $0x1f8] sm:$0xff]
    %v332 = vld [vmem:[#allocation8 + $0x200] sm:$0xff]
    %v333 = vld [vmem:[#allocation8 + $0x208] sm:$0xff]
    %v334 = vld [vmem:[#allocation8 + $0x210] sm:$0xff]
    %v335 = vld [vmem:[#allocation8 + $0x218] sm:$0xff]
    %v336 = vld [vmem:[#allocation8 + $0x220] sm:$0xff]
    %v337 = vld [vmem:[#allocation8 + $0x228] sm:$0xff]
    %v338 = vld [vmem:[#allocation8 + $0x230] sm:$0xff]
    %v339 = vld [vmem:[#allocation8 + $0x238] sm:$0xff]
    %v340 = vld [vmem:[#allocation8 + $0x240] sm:$0xff]
    %v341 = vld [vmem:[#allocation8 + $0x248] sm:$0xff]
    %v342 = vld [vmem:[#allocation8 + $0x250] sm:$0xff]
    %v343 = vld [vmem:[#allocation8 + $0x258] sm:$0xff]
    %v344 = vld [vmem:[#allocation8 + $0x260] sm:$0xff]
    %v345 = vld [vmem:[#allocation8 + $0x268] sm:$0xff]
    %v346 = vld [vmem:[#allocation8 + $0x270] sm:$0xff]
    %v347 = vld [vmem:[#allocation8 + $0x278] sm:$0xff]
    %v348 = vld [vmem:[#allocation8 + $0x280] sm:$0xff]
    %v349 = vld [vmem:[#allocation8 + $0x288] sm:$0xff]
    %v350 = vld [vmem:[#allocation8 + $0x290] sm:$0xff]
    %v351 = vld [vmem:[#allocation8 + $0x298] sm:$0xff]
    %v352 = vld [vmem:[#allocation8 + $0x2a0] sm:$0xff]
    %v353 = vld [vmem:[#allocation8 + $0x2a8] sm:$0xff]
    %v354 = vld [vmem:[#allocation8 + $0x2b0] sm:$0xff]
    %v355 = vld [vmem:[#allocation8 + $0x2b8] sm:$0xff]
    %v356 = vld [vmem:[#allocation8 + $0x2c0] sm:$0xff]
    %v357 = vld [vmem:[#allocation8 + $0x2c8] sm:$0xff]
    %v358 = vld [vmem:[#allocation8 + $0x2d0] sm:$0xff]
    %v359 = vld [vmem:[#allocation8 + $0x2d8] sm:$0xff]
    %v360 = vld [vmem:[#allocation8 + $0x2e0] sm:$0xff]
    %v361 = vld [vmem:[#allocation8 + $0x2e8] sm:$0xff]
    %v362 = vld [vmem:[#allocation8 + $0x2f0] sm:$0xff]
    %v363 = vld [vmem:[#allocation8 + $0x2f8] sm:$0xff]
    %v364 = vld [vmem:[#allocation8 + $0x300] sm:$0xff]
    %v365 = vld [vmem:[#allocation8 + $0x308] sm:$0xff]
    %v366 = vld [vmem:[#allocation8 + $0x310] sm:$0xff]
    %v367 = vld [vmem:[#allocation8 + $0x318] sm:$0xff]
    %v368 = vld [vmem:[#allocation8 + $0x320] sm:$0xff]
    %v369 = vld [vmem:[#allocation8 + $0x328] sm:$0xff]
    %v370 = vld [vmem:[#allocation8 + $0x330] sm:$0xff]
    %v371 = vld [vmem:[#allocation8 + $0x338] sm:$0xff]
    %v372 = vld [vmem:[#allocation8 + $0x340] sm:$0xff]
    %v373 = vld [vmem:[#allocation8 + $0x348] sm:$0xff]
    %v374 = vld [vmem:[#allocation8 + $0x350] sm:$0xff]
    %v375 = vld [vmem:[#allocation8 + $0x358] sm:$0xff]
    %v376 = vld [vmem:[#allocation8 + $0x360] sm:$0xff]
    %v377 = vld [vmem:[#allocation8 + $0x368] sm:$0xff]
    %v378 = vld [vmem:[#allocation8 + $0x370] sm:$0xff]
    %v379 = vld [vmem:[#allocation8 + $0x378] sm:$0xff]
    %v380 = vld [vmem:[#allocation8 + $0x380] sm:$0xff]
    %v381 = vld [vmem:[#allocation8 + $0x388] sm:$0xff]
    %v382 = vld [vmem:[#allocation8 + $0x390] sm:$0xff]
    %v383 = vld [vmem:[#allocation8 + $0x398] sm:$0xff]
    %v384 = vld [vmem:[#allocation8 + $0x3a0] sm:$0xff]
    %v385 = vld [vmem:[#allocation8 + $0x3a8] sm:$0xff]
    %v386 = vld [vmem:[#allocation8 + $0x3b0] sm:$0xff]
    %v387 = vld [vmem:[#allocation8 + $0x3b8] sm:$0xff]
    %v388 = vld [vmem:[#allocation8 + $0x3c0] sm:$0xff]
    %v389 = vld [vmem:[#allocation8 + $0x3c8] sm:$0xff]
    %v390 = vld [vmem:[#allocation8 + $0x3d0] sm:$0xff]
    %v391 = vld [vmem:[#allocation8 + $0x3d8] sm:$0xff]
    %v392 = vld [vmem:[#allocation8 + $0x3e0] sm:$0xff]
    %v393 = vld [vmem:[#allocation8 + $0x3e8] sm:$0xff]
    %v394 = vld [vmem:[#allocation8 + $0x3f0] sm:$0xff]
    %v395 = vld [vmem:[#allocation8 + $0x3f8] sm:$0xff]
    %v396 = vld [vmem:[#allocation8 + $0x400] sm:$0xff]
    %v397 = vld [vmem:[#allocation8 + $0x408] sm:$0xff]
    %v398 = vld [vmem:[#allocation8 + $0x410] sm:$0xff]
    %v399 = vld [vmem:[#allocation8 + $0x418] sm:$0xff]
    %v400 = vld [vmem:[#allocation8 + $0x420] sm:$0xff]
    %v401 = vld [vmem:[#allocation8 + $0x428] sm:$0xff]
    %v402 = vld [vmem:[#allocation8 + $0x430] sm:$0xff]
    %v403 = vld [vmem:[#allocation8 + $0x438] sm:$0xff]
    %v404 = vld [vmem:[#allocation8 + $0x440] sm:$0xff]
    %v405 = vld [vmem:[#allocation8 + $0x448] sm:$0xff]
    %v406 = vld [vmem:[#allocation8 + $0x450] sm:$0xff]
    %v407 = vld [vmem:[#allocation8 + $0x458] sm:$0xff]
    %v408 = vld [vmem:[#allocation8 + $0x460] sm:$0xff]
    %v409 = vld [vmem:[#allocation8 + $0x468] sm:$0xff]
    %v410 = vld [vmem:[#allocation8 + $0x470] sm:$0xff]
    %v411 = vld [vmem:[#allocation8 + $0x478] sm:$0xff]
    %v412 = vld [vmem:[#allocation8 + $0x480] sm:$0xff]
    %v413 = vld [vmem:[#allocation8 + $0x488] sm:$0xff]
    %v414 = vld [vmem:[#allocation8 + $0x490] sm:$0xff]
    %v415 = vld [vmem:[#allocation8 + $0x498] sm:$0xff]
    %v416 = vld [vmem:[#allocation8 + $0x4a0] sm:$0xff]
    %v417 = vld [vmem:[#allocation8 + $0x4a8] sm:$0xff]
    %v418 = vld [vmem:[#allocation8 + $0x4b0] sm:$0xff]
    %v419 = vld [vmem:[#allocation8 + $0x4b8] sm:$0xff]
    %v420 = vld [vmem:[#allocation8 + $0x4c0] sm:$0xff]
    %v421 = vld [vmem:[#allocation8 + $0x4c8] sm:$0xff]
    %v422 = vld [vmem:[#allocation8 + $0x4d0] sm:$0xff]
    %v423 = vld [vmem:[#allocation8 + $0x4d8] sm:$0xff]
    %v424 = vld [vmem:[#allocation8 + $0x4e0] sm:$0xff]
    %v425 = vld [vmem:[#allocation8 + $0x4e8] sm:$0xff]
    %v426 = vld [vmem:[#allocation8 + $0x4f0] sm:$0xff]
    %v427 = vld [vmem:[#allocation8 + $0x4f8] sm:$0xff]
    %v428 = vld [vmem:[#allocation8 + $0x500] sm:$0xff]
    %v429 = vld [vmem:[#allocation8 + $0x508] sm:$0xff]
    %v430 = vld [vmem:[#allocation8 + $0x510] sm:$0xff]
    %v431 = vld [vmem:[#allocation8 + $0x518] sm:$0xff]
    %v432 = vld [vmem:[#allocation8 + $0x520] sm:$0xff]
    %v433 = vld [vmem:[#allocation8 + $0x528] sm:$0xff]
    %v434 = vld [vmem:[#allocation8 + $0x530] sm:$0xff]
    %v435 = vld [vmem:[#allocation8 + $0x538] sm:$0xff]
    %v436 = vld [vmem:[#allocation8 + $0x540] sm:$0xff]
    %v437 = vld [vmem:[#allocation8 + $0x548] sm:$0xff]
    %v438 = vld [vmem:[#allocation8 + $0x550] sm:$0xff]
    %v439 = vld [vmem:[#allocation8 + $0x558] sm:$0xff]
    %v440 = vld [vmem:[#allocation8 + $0x560] sm:$0xff]
    %v441 = vld [vmem:[#allocation8 + $0x568] sm:$0xff]
    %v442 = vld [vmem:[#allocation8 + $0x570] sm:$0xff]
    %v443 = vld [vmem:[#allocation8 + $0x578] sm:$0xff]
    %v444 = vld [vmem:[#allocation8 + $0x580] sm:$0xff]
    %v445 = vld [vmem:[#allocation8 + $0x588] sm:$0xff]
    %v446 = vld [vmem:[#allocation8 + $0x590] sm:$0xff]
    %v447 = vld [vmem:[#allocation8 + $0x598] sm:$0xff]
    %v448 = vld [vmem:[#allocation8 + $0x5a0] sm:$0xff]
    %v449 = vld [vmem:[#allocation8 + $0x5a8] sm:$0xff]
    %v450 = vld [vmem:[#allocation8 + $0x5b0] sm:$0xff]
    %v451 = vld [vmem:[#allocation8 + $0x5b8] sm:$0xff]
    %v452 = vld [vmem:[#allocation8 + $0x5c0] sm:$0xff]
    %v453 = vld [vmem:[#allocation8 + $0x5c8] sm:$0xff]
    %v454 = vld [vmem:[#allocation8 + $0x5d0] sm:$0xff]
    %v455 = vld [vmem:[#allocation8 + $0x5d8] sm:$0xff]
    %v456 = vld [vmem:[#allocation8 + $0x5e0] sm:$0xff]
    %v457 = vld [vmem:[#allocation8 + $0x5e8] sm:$0xff]
    %v458 = vld [vmem:[#allocation8 + $0x5f0] sm:$0xff]
    %v459 = vld [vmem:[#allocation8 + $0x5f8] sm:$0xff]
    %v460 = vld [vmem:[#allocation8 + $0x600] sm:$0xff]
    %v461 = vld [vmem:[#allocation8 + $0x608] sm:$0xff]
    %v462 = vld [vmem:[#allocation8 + $0x610] sm:$0xff]
    %v463 = vld [vmem:[#allocation8 + $0x618] sm:$0xff]
    %v464 = vld [vmem:[#allocation8 + $0x620] sm:$0xff]
    %v465 = vld [vmem:[#allocation8 + $0x628] sm:$0xff]
    %v466 = vld [vmem:[#allocation8 + $0x630] sm:$0xff]
    %v467 = vld [vmem:[#allocation8 + $0x638] sm:$0xff]
    %v468 = vld [vmem:[#allocation8 + $0x640] sm:$0xff]
    %v469 = vld [vmem:[#allocation8 + $0x648] sm:$0xff]
    %v470 = vld [vmem:[#allocation8 + $0x650] sm:$0xff]
    %v471 = vld [vmem:[#allocation8 + $0x658] sm:$0xff]
    %v472 = vld [vmem:[#allocation8 + $0x660] sm:$0xff]
    %v473 = vld [vmem:[#allocation8 + $0x668] sm:$0xff]
    %v474 = vld [vmem:[#allocation8 + $0x670] sm:$0xff]
    %v475 = vld [vmem:[#allocation8 + $0x678] sm:$0xff]
    %v476 = vld [vmem:[#allocation8 + $0x680] sm:$0xff]
    %v477 = vld [vmem:[#allocation8 + $0x688] sm:$0xff]
    %v478 = vld [vmem:[#allocation8 + $0x690] sm:$0xff]
    %v479 = vld [vmem:[#allocation8 + $0x698] sm:$0xff]
    %v480 = vld [vmem:[#allocation8 + $0x6a0] sm:$0xff]
    %v481 = vld [vmem:[#allocation8 + $0x6a8] sm:$0xff]
    %v482 = vld [vmem:[#allocation8 + $0x6b0] sm:$0xff]
    %v483 = vld [vmem:[#allocation8 + $0x6b8] sm:$0xff]
    %v484 = vld [vmem:[#allocation8 + $0x6c0] sm:$0xff]
    %v485 = vld [vmem:[#allocation8 + $0x6c8] sm:$0xff]
    %v486 = vld [vmem:[#allocation8 + $0x6d0] sm:$0xff]
    %v487 = vld [vmem:[#allocation8 + $0x6d8] sm:$0xff]
    %v488 = vld [vmem:[#allocation8 + $0x6e0] sm:$0xff]
    %v489 = vld [vmem:[#allocation8 + $0x6e8] sm:$0xff]
    %v490 = vld [vmem:[#allocation8 + $0x6f0] sm:$0xff]
    %v491 = vld [vmem:[#allocation8 + $0x6f8] sm:$0xff]
    %v492 = vld [vmem:[#allocation8 + $0x700] sm:$0xff]
    %v493 = vld [vmem:[#allocation8 + $0x708] sm:$0xff]
    %v494 = vld [vmem:[#allocation8 + $0x710] sm:$0xff]
    %v495 = vld [vmem:[#allocation8 + $0x718] sm:$0xff]
    %v496 = vld [vmem:[#allocation8 + $0x720] sm:$0xff]
    %v497 = vld [vmem:[#allocation8 + $0x728] sm:$0xff]
    %v498 = vld [vmem:[#allocation8 + $0x730] sm:$0xff]
    %v499 = vld [vmem:[#allocation8 + $0x738] sm:$0xff]
    %v500 = vld [vmem:[#allocation8 + $0x740] sm:$0xff]
    %v501 = vld [vmem:[#allocation8 + $0x748] sm:$0xff]
    %v502 = vld [vmem:[#allocation8 + $0x750] sm:$0xff]
    %v503 = vld [vmem:[#allocation8 + $0x758] sm:$0xff]
    %v504 = vld [vmem:[#allocation8 + $0x760] sm:$0xff]
    %v505 = vld [vmem:[#allocation8 + $0x768] sm:$0xff]
    %v506 = vld [vmem:[#allocation8 + $0x770] sm:$0xff]
    %v507 = vld [vmem:[#allocation8 + $0x778] sm:$0xff]
    %v508 = vld [vmem:[#allocation8 + $0x780] sm:$0xff]
    %v509 = vld [vmem:[#allocation8 + $0x788] sm:$0xff]
    %v510 = vld [vmem:[#allocation8 + $0x790] sm:$0xff]
    %v511 = vld [vmem:[#allocation8 + $0x798] sm:$0xff]
    %v512 = vld [vmem:[#allocation8 + $0x7a0] sm:$0xff]
    %v513 = vld [vmem:[#allocation8 + $0x7a8] sm:$0xff]
    %v514 = vld [vmem:[#allocation8 + $0x7b0] sm:$0xff]
    %v515 = vld [vmem:[#allocation8 + $0x7b8] sm:$0xff]
    %v516 = vld [vmem:[#allocation8 + $0x7c0] sm:$0xff]
    %v517 = vld [vmem:[#allocation8 + $0x7c8] sm:$0xff]
    %v518 = vld [vmem:[#allocation8 + $0x7d0] sm:$0xff]
    %v519 = vld [vmem:[#allocation8 + $0x7d8] sm:$0xff]
    %v520 = vld [vmem:[#allocation8 + $0x7e0] sm:$0xff]
    %v521 = vld [vmem:[#allocation8 + $0x7e8] sm:$0xff]
    %v522 = vld [vmem:[#allocation8 + $0x7f0] sm:$0xff]
    %v523 = vld [vmem:[#allocation8 + $0x7f8] sm:$0xff]
    %v524 = vunpack.c.l.bf16 %v268
    %v525 = vunpack.c.h.bf16 %v268
    %v526 = vunpack.c.l.bf16 %v269
    %v527 = vunpack.c.h.bf16 %v269
    %v528 = vunpack.c.l.bf16 %v270
    %v529 = vunpack.c.h.bf16 %v270
    %v530 = vunpack.c.l.bf16 %v271
    %v531 = vunpack.c.h.bf16 %v271
    %v532 = vunpack.c.l.bf16 %v272
    %v533 = vunpack.c.h.bf16 %v272
    %v534 = vunpack.c.l.bf16 %v273
    %v535 = vunpack.c.h.bf16 %v273
    %v536 = vunpack.c.l.bf16 %v274
    %v537 = vunpack.c.h.bf16 %v274
    %v538 = vunpack.c.l.bf16 %v275
    %v539 = vunpack.c.h.bf16 %v275
    %v540 = vunpack.c.l.bf16 %v276
    %v541 = vunpack.c.h.bf16 %v276
    %v542 = vunpack.c.l.bf16 %v277
    %v543 = vunpack.c.h.bf16 %v277
    %v544 = vunpack.c.l.bf16 %v278
    %v545 = vunpack.c.h.bf16 %v278
    %v546 = vunpack.c.l.bf16 %v279
    %v547 = vunpack.c.h.bf16 %v279
    %v548 = vunpack.c.l.bf16 %v280
    %v549 = vunpack.c.h.bf16 %v280
    %v550 = vunpack.c.l.bf16 %v281
    %v551 = vunpack.c.h.bf16 %v281
    %v552 = vunpack.c.l.bf16 %v282
    %v553 = vunpack.c.h.bf16 %v282
    %v554 = vunpack.c.l.bf16 %v283
    %v555 = vunpack.c.h.bf16 %v283
    %v556 = vunpack.c.l.bf16 %v284
    %v557 = vunpack.c.h.bf16 %v284
    %v558 = vunpack.c.l.bf16 %v285
    %v559 = vunpack.c.h.bf16 %v285
    %v560 = vunpack.c.l.bf16 %v286
    %v561 = vunpack.c.h.bf16 %v286
    %v562 = vunpack.c.l.bf16 %v287
    %v563 = vunpack.c.h.bf16 %v287
    %v564 = vunpack.c.l.bf16 %v288
    %v565 = vunpack.c.h.bf16 %v288
    %v566 = vunpack.c.l.bf16 %v289
    %v567 = vunpack.c.h.bf16 %v289
    %v568 = vunpack.c.l.bf16 %v290
    %v569 = vunpack.c.h.bf16 %v290
    %v570 = vunpack.c.l.bf16 %v291
    %v571 = vunpack.c.h.bf16 %v291
    %v572 = vunpack.c.l.bf16 %v292
    %v573 = vunpack.c.h.bf16 %v292
    %v574 = vunpack.c.l.bf16 %v293
    %v575 = vunpack.c.h.bf16 %v293
    %v576 = vunpack.c.l.bf16 %v294
    %v577 = vunpack.c.h.bf16 %v294
    %v578 = vunpack.c.l.bf16 %v295
    %v579 = vunpack.c.h.bf16 %v295
    %v580 = vunpack.c.l.bf16 %v296
    %v581 = vunpack.c.h.bf16 %v296
    %v582 = vunpack.c.l.bf16 %v297
    %v583 = vunpack.c.h.bf16 %v297
    %v584 = vunpack.c.l.bf16 %v298
    %v585 = vunpack.c.h.bf16 %v298
    %v586 = vunpack.c.l.bf16 %v299
    %v587 = vunpack.c.h.bf16 %v299
    %v588 = vunpack.c.l.bf16 %v300
    %v589 = vunpack.c.h.bf16 %v300
    %v590 = vunpack.c.l.bf16 %v301
    %v591 = vunpack.c.h.bf16 %v301
    %v592 = vunpack.c.l.bf16 %v302
    %v593 = vunpack.c.h.bf16 %v302
    %v594 = vunpack.c.l.bf16 %v303
    %v595 = vunpack.c.h.bf16 %v303
    %v596 = vunpack.c.l.bf16 %v304
    %v597 = vunpack.c.h.bf16 %v304
    %v598 = vunpack.c.l.bf16 %v305
    %v599 = vunpack.c.h.bf16 %v305
    %v600 = vunpack.c.l.bf16 %v306
    %v601 = vunpack.c.h.bf16 %v306
    %v602 = vunpack.c.l.bf16 %v307
    %v603 = vunpack.c.h.bf16 %v307
    %v604 = vunpack.c.l.bf16 %v308
    %v605 = vunpack.c.h.bf16 %v308
    %v606 = vunpack.c.l.bf16 %v309
    %v607 = vunpack.c.h.bf16 %v309
    %v608 = vunpack.c.l.bf16 %v310
    %v609 = vunpack.c.h.bf16 %v310
    %v610 = vunpack.c.l.bf16 %v311
    %v611 = vunpack.c.h.bf16 %v311
    %v612 = vunpack.c.l.bf16 %v312
    %v613 = vunpack.c.h.bf16 %v312
    %v614 = vunpack.c.l.bf16 %v313
    %v615 = vunpack.c.h.bf16 %v313
    %v616 = vunpack.c.l.bf16 %v314
    %v617 = vunpack.c.h.bf16 %v314
    %v618 = vunpack.c.l.bf16 %v315
    %v619 = vunpack.c.h.bf16 %v315
    %v620 = vunpack.c.l.bf16 %v316
    %v621 = vunpack.c.h.bf16 %v316
    %v622 = vunpack.c.l.bf16 %v317
    %v623 = vunpack.c.h.bf16 %v317
    %v624 = vunpack.c.l.bf16 %v318
    %v625 = vunpack.c.h.bf16 %v318
    %v626 = vunpack.c.l.bf16 %v319
    %v627 = vunpack.c.h.bf16 %v319
    %v628 = vunpack.c.l.bf16 %v320
    %v629 = vunpack.c.h.bf16 %v320
    %v630 = vunpack.c.l.bf16 %v321
    %v631 = vunpack.c.h.bf16 %v321
    %v632 = vunpack.c.l.bf16 %v322
    %v633 = vunpack.c.h.bf16 %v322
    %v634 = vunpack.c.l.bf16 %v323
    %v635 = vunpack.c.h.bf16 %v323
    %v636 = vunpack.c.l.bf16 %v324
    %v637 = vunpack.c.h.bf16 %v324
    %v638 = vunpack.c.l.bf16 %v325
    %v639 = vunpack.c.h.bf16 %v325
    %v640 = vunpack.c.l.bf16 %v326
    %v641 = vunpack.c.h.bf16 %v326
    %v642 = vunpack.c.l.bf16 %v327
    %v643 = vunpack.c.h.bf16 %v327
    %v644 = vunpack.c.l.bf16 %v328
    %v645 = vunpack.c.h.bf16 %v328
    %v646 = vunpack.c.l.bf16 %v329
    %v647 = vunpack.c.h.bf16 %v329
    %v648 = vunpack.c.l.bf16 %v330
    %v649 = vunpack.c.h.bf16 %v330
    %v650 = vunpack.c.l.bf16 %v331
    %v651 = vunpack.c.h.bf16 %v331
    %v652 = vunpack.c.l.bf16 %v332
    %v653 = vunpack.c.h.bf16 %v332
    %v654 = vunpack.c.l.bf16 %v333
    %v655 = vunpack.c.h.bf16 %v333
    %v656 = vunpack.c.l.bf16 %v334
    %v657 = vunpack.c.h.bf16 %v334
    %v658 = vunpack.c.l.bf16 %v335
    %v659 = vunpack.c.h.bf16 %v335
    %v660 = vunpack.c.l.bf16 %v336
    %v661 = vunpack.c.h.bf16 %v336
    %v662 = vunpack.c.l.bf16 %v337
    %v663 = vunpack.c.h.bf16 %v337
    %v664 = vunpack.c.l.bf16 %v338
    %v665 = vunpack.c.h.bf16 %v338
    %v666 = vunpack.c.l.bf16 %v339
    %v667 = vunpack.c.h.bf16 %v339
    %v668 = vunpack.c.l.bf16 %v340
    %v669 = vunpack.c.h.bf16 %v340
    %v670 = vunpack.c.l.bf16 %v341
    %v671 = vunpack.c.h.bf16 %v341
    %v672 = vunpack.c.l.bf16 %v342
    %v673 = vunpack.c.h.bf16 %v342
    %v674 = vunpack.c.l.bf16 %v343
    %v675 = vunpack.c.h.bf16 %v343
    %v676 = vunpack.c.l.bf16 %v344
    %v677 = vunpack.c.h.bf16 %v344
    %v678 = vunpack.c.l.bf16 %v345
    %v679 = vunpack.c.h.bf16 %v345
    %v680 = vunpack.c.l.bf16 %v346
    %v681 = vunpack.c.h.bf16 %v346
    %v682 = vunpack.c.l.bf16 %v347
    %v683 = vunpack.c.h.bf16 %v347
    %v684 = vunpack.c.l.bf16 %v348
    %v685 = vunpack.c.h.bf16 %v348
    %v686 = vunpack.c.l.bf16 %v349
    %v687 = vunpack.c.h.bf16 %v349
    %v688 = vunpack.c.l.bf16 %v350
    %v689 = vunpack.c.h.bf16 %v350
    %v690 = vunpack.c.l.bf16 %v351
    %v691 = vunpack.c.h.bf16 %v351
    %v692 = vunpack.c.l.bf16 %v352
    %v693 = vunpack.c.h.bf16 %v352
    %v694 = vunpack.c.l.bf16 %v353
    %v695 = vunpack.c.h.bf16 %v353
    %v696 = vunpack.c.l.bf16 %v354
    %v697 = vunpack.c.h.bf16 %v354
    %v698 = vunpack.c.l.bf16 %v355
    %v699 = vunpack.c.h.bf16 %v355
    %v700 = vunpack.c.l.bf16 %v356
    %v701 = vunpack.c.h.bf16 %v356
    %v702 = vunpack.c.l.bf16 %v357
    %v703 = vunpack.c.h.bf16 %v357
    %v704 = vunpack.c.l.bf16 %v358
    %v705 = vunpack.c.h.bf16 %v358
    %v706 = vunpack.c.l.bf16 %v359
    %v707 = vunpack.c.h.bf16 %v359
    %v708 = vunpack.c.l.bf16 %v360
    %v709 = vunpack.c.h.bf16 %v360
    %v710 = vunpack.c.l.bf16 %v361
    %v711 = vunpack.c.h.bf16 %v361
    %v712 = vunpack.c.l.bf16 %v362
    %v713 = vunpack.c.h.bf16 %v362
    %v714 = vunpack.c.l.bf16 %v363
    %v715 = vunpack.c.h.bf16 %v363
    %v716 = vunpack.c.l.bf16 %v364
    %v717 = vunpack.c.h.bf16 %v364
    %v718 = vunpack.c.l.bf16 %v365
    %v719 = vunpack.c.h.bf16 %v365
    %v720 = vunpack.c.l.bf16 %v366
    %v721 = vunpack.c.h.bf16 %v366
    %v722 = vunpack.c.l.bf16 %v367
    %v723 = vunpack.c.h.bf16 %v367
    %v724 = vunpack.c.l.bf16 %v368
    %v725 = vunpack.c.h.bf16 %v368
    %v726 = vunpack.c.l.bf16 %v369
    %v727 = vunpack.c.h.bf16 %v369
    %v728 = vunpack.c.l.bf16 %v370
    %v729 = vunpack.c.h.bf16 %v370
    %v730 = vunpack.c.l.bf16 %v371
    %v731 = vunpack.c.h.bf16 %v371
    %v732 = vunpack.c.l.bf16 %v372
    %v733 = vunpack.c.h.bf16 %v372
    %v734 = vunpack.c.l.bf16 %v373
    %v735 = vunpack.c.h.bf16 %v373
    %v736 = vunpack.c.l.bf16 %v374
    %v737 = vunpack.c.h.bf16 %v374
    %v738 = vunpack.c.l.bf16 %v375
    %v739 = vunpack.c.h.bf16 %v375
    %v740 = vunpack.c.l.bf16 %v376
    %v741 = vunpack.c.h.bf16 %v376
    %v742 = vunpack.c.l.bf16 %v377
    %v743 = vunpack.c.h.bf16 %v377
    %v744 = vunpack.c.l.bf16 %v378
    %v745 = vunpack.c.h.bf16 %v378
    %v746 = vunpack.c.l.bf16 %v379
    %v747 = vunpack.c.h.bf16 %v379
    %v748 = vunpack.c.l.bf16 %v380
    %v749 = vunpack.c.h.bf16 %v380
    %v750 = vunpack.c.l.bf16 %v381
    %v751 = vunpack.c.h.bf16 %v381
    %v752 = vunpack.c.l.bf16 %v382
    %v753 = vunpack.c.h.bf16 %v382
    %v754 = vunpack.c.l.bf16 %v383
    %v755 = vunpack.c.h.bf16 %v383
    %v756 = vunpack.c.l.bf16 %v384
    %v757 = vunpack.c.h.bf16 %v384
    %v758 = vunpack.c.l.bf16 %v385
    %v759 = vunpack.c.h.bf16 %v385
    %v760 = vunpack.c.l.bf16 %v386
    %v761 = vunpack.c.h.bf16 %v386
    %v762 = vunpack.c.l.bf16 %v387
    %v763 = vunpack.c.h.bf16 %v387
    %v764 = vunpack.c.l.bf16 %v388
    %v765 = vunpack.c.h.bf16 %v388
    %v766 = vunpack.c.l.bf16 %v389
    %v767 = vunpack.c.h.bf16 %v389
    %v768 = vunpack.c.l.bf16 %v390
    %v769 = vunpack.c.h.bf16 %v390
    %v770 = vunpack.c.l.bf16 %v391
    %v771 = vunpack.c.h.bf16 %v391
    %v772 = vunpack.c.l.bf16 %v392
    %v773 = vunpack.c.h.bf16 %v392
    %v774 = vunpack.c.l.bf16 %v393
    %v775 = vunpack.c.h.bf16 %v393
    %v776 = vunpack.c.l.bf16 %v394
    %v777 = vunpack.c.h.bf16 %v394
    %v778 = vunpack.c.l.bf16 %v395
    %v779 = vunpack.c.h.bf16 %v395
    %v780 = vunpack.c.l.bf16 %v396
    %v781 = vunpack.c.h.bf16 %v396
    %v782 = vunpack.c.l.bf16 %v397
    %v783 = vunpack.c.h.bf16 %v397
    %v784 = vunpack.c.l.bf16 %v398
    %v785 = vunpack.c.h.bf16 %v398
    %v786 = vunpack.c.l.bf16 %v399
    %v787 = vunpack.c.h.bf16 %v399
    %v788 = vunpack.c.l.bf16 %v400
    %v789 = vunpack.c.h.bf16 %v400
    %v790 = vunpack.c.l.bf16 %v401
    %v791 = vunpack.c.h.bf16 %v401
    %v792 = vunpack.c.l.bf16 %v402
    %v793 = vunpack.c.h.bf16 %v402
    %v794 = vunpack.c.l.bf16 %v403
    %v795 = vunpack.c.h.bf16 %v403
    %v796 = vunpack.c.l.bf16 %v404
    %v797 = vunpack.c.h.bf16 %v404
    %v798 = vunpack.c.l.bf16 %v405
    %v799 = vunpack.c.h.bf16 %v405
    %v800 = vunpack.c.l.bf16 %v406
    %v801 = vunpack.c.h.bf16 %v406
    %v802 = vunpack.c.l.bf16 %v407
    %v803 = vunpack.c.h.bf16 %v407
    %v804 = vunpack.c.l.bf16 %v408
    %v805 = vunpack.c.h.bf16 %v408
    %v806 = vunpack.c.l.bf16 %v409
    %v807 = vunpack.c.h.bf16 %v409
    %v808 = vunpack.c.l.bf16 %v410
    %v809 = vunpack.c.h.bf16 %v410
    %v810 = vunpack.c.l.bf16 %v411
    %v811 = vunpack.c.h.bf16 %v411
    %v812 = vunpack.c.l.bf16 %v412
    %v813 = vunpack.c.h.bf16 %v412
    %v814 = vunpack.c.l.bf16 %v413
    %v815 = vunpack.c.h.bf16 %v413
    %v816 = vunpack.c.l.bf16 %v414
    %v817 = vunpack.c.h.bf16 %v414
    %v818 = vunpack.c.l.bf16 %v415
    %v819 = vunpack.c.h.bf16 %v415
    %v820 = vunpack.c.l.bf16 %v416
    %v821 = vunpack.c.h.bf16 %v416
    %v822 = vunpack.c.l.bf16 %v417
    %v823 = vunpack.c.h.bf16 %v417
    %v824 = vunpack.c.l.bf16 %v418
    %v825 = vunpack.c.h.bf16 %v418
    %v826 = vunpack.c.l.bf16 %v419
    %v827 = vunpack.c.h.bf16 %v419
    %v828 = vunpack.c.l.bf16 %v420
    %v829 = vunpack.c.h.bf16 %v420
    %v830 = vunpack.c.l.bf16 %v421
    %v831 = vunpack.c.h.bf16 %v421
    %v832 = vunpack.c.l.bf16 %v422
    %v833 = vunpack.c.h.bf16 %v422
    %v834 = vunpack.c.l.bf16 %v423
    %v835 = vunpack.c.h.bf16 %v423
    %v836 = vunpack.c.l.bf16 %v424
    %v837 = vunpack.c.h.bf16 %v424
    %v838 = vunpack.c.l.bf16 %v425
    %v839 = vunpack.c.h.bf16 %v425
    %v840 = vunpack.c.l.bf16 %v426
    %v841 = vunpack.c.h.bf16 %v426
    %v842 = vunpack.c.l.bf16 %v427
    %v843 = vunpack.c.h.bf16 %v427
    %v844 = vunpack.c.l.bf16 %v428
    %v845 = vunpack.c.h.bf16 %v428
    %v846 = vunpack.c.l.bf16 %v429
    %v847 = vunpack.c.h.bf16 %v429
    %v848 = vunpack.c.l.bf16 %v430
    %v849 = vunpack.c.h.bf16 %v430
    %v850 = vunpack.c.l.bf16 %v431
    %v851 = vunpack.c.h.bf16 %v431
    %v852 = vunpack.c.l.bf16 %v432
    %v853 = vunpack.c.h.bf16 %v432
    %v854 = vunpack.c.l.bf16 %v433
    %v855 = vunpack.c.h.bf16 %v433
    %v856 = vunpack.c.l.bf16 %v434
    %v857 = vunpack.c.h.bf16 %v434
    %v858 = vunpack.c.l.bf16 %v435
    %v859 = vunpack.c.h.bf16 %v435
    %v860 = vunpack.c.l.bf16 %v436
    %v861 = vunpack.c.h.bf16 %v436
    %v862 = vunpack.c.l.bf16 %v437
    %v863 = vunpack.c.h.bf16 %v437
    %v864 = vunpack.c.l.bf16 %v438
    %v865 = vunpack.c.h.bf16 %v438
    %v866 = vunpack.c.l.bf16 %v439
    %v867 = vunpack.c.h.bf16 %v439
    %v868 = vunpack.c.l.bf16 %v440
    %v869 = vunpack.c.h.bf16 %v440
    %v870 = vunpack.c.l.bf16 %v441
    %v871 = vunpack.c.h.bf16 %v441
    %v872 = vunpack.c.l.bf16 %v442
    %v873 = vunpack.c.h.bf16 %v442
    %v874 = vunpack.c.l.bf16 %v443
    %v875 = vunpack.c.h.bf16 %v443
    %v876 = vunpack.c.l.bf16 %v444
    %v877 = vunpack.c.h.bf16 %v444
    %v878 = vunpack.c.l.bf16 %v445
    %v879 = vunpack.c.h.bf16 %v445
    %v880 = vunpack.c.l.bf16 %v446
    %v881 = vunpack.c.h.bf16 %v446
    %v882 = vunpack.c.l.bf16 %v447
    %v883 = vunpack.c.h.bf16 %v447
    %v884 = vunpack.c.l.bf16 %v448
    %v885 = vunpack.c.h.bf16 %v448
    %v886 = vunpack.c.l.bf16 %v449
    %v887 = vunpack.c.h.bf16 %v449
    %v888 = vunpack.c.l.bf16 %v450
    %v889 = vunpack.c.h.bf16 %v450
    %v890 = vunpack.c.l.bf16 %v451
    %v891 = vunpack.c.h.bf16 %v451
    %v892 = vunpack.c.l.bf16 %v452
    %v893 = vunpack.c.h.bf16 %v452
    %v894 = vunpack.c.l.bf16 %v453
    %v895 = vunpack.c.h.bf16 %v453
    %v896 = vunpack.c.l.bf16 %v454
    %v897 = vunpack.c.h.bf16 %v454
    %v898 = vunpack.c.l.bf16 %v455
    %v899 = vunpack.c.h.bf16 %v455
    %v900 = vunpack.c.l.bf16 %v456
    %v901 = vunpack.c.h.bf16 %v456
    %v902 = vunpack.c.l.bf16 %v457
    %v903 = vunpack.c.h.bf16 %v457
    %v904 = vunpack.c.l.bf16 %v458
    %v905 = vunpack.c.h.bf16 %v458
    %v906 = vunpack.c.l.bf16 %v459
    %v907 = vunpack.c.h.bf16 %v459
    %v908 = vunpack.c.l.bf16 %v460
    %v909 = vunpack.c.h.bf16 %v460
    %v910 = vunpack.c.l.bf16 %v461
    %v911 = vunpack.c.h.bf16 %v461
    %v912 = vunpack.c.l.bf16 %v462
    %v913 = vunpack.c.h.bf16 %v462
    %v914 = vunpack.c.l.bf16 %v463
    %v915 = vunpack.c.h.bf16 %v463
    %v916 = vunpack.c.l.bf16 %v464
    %v917 = vunpack.c.h.bf16 %v464
    %v918 = vunpack.c.l.bf16 %v465
    %v919 = vunpack.c.h.bf16 %v465
    %v920 = vunpack.c.l.bf16 %v466
    %v921 = vunpack.c.h.bf16 %v466
    %v922 = vunpack.c.l.bf16 %v467
    %v923 = vunpack.c.h.bf16 %v467
    %v924 = vunpack.c.l.bf16 %v468
    %v925 = vunpack.c.h.bf16 %v468
    %v926 = vunpack.c.l.bf16 %v469
    %v927 = vunpack.c.h.bf16 %v469
    %v928 = vunpack.c.l.bf16 %v470
    %v929 = vunpack.c.h.bf16 %v470
    %v930 = vunpack.c.l.bf16 %v471
    %v931 = vunpack.c.h.bf16 %v471
    %v932 = vunpack.c.l.bf16 %v472
    %v933 = vunpack.c.h.bf16 %v472
    %v934 = vunpack.c.l.bf16 %v473
    %v935 = vunpack.c.h.bf16 %v473
    %v936 = vunpack.c.l.bf16 %v474
    %v937 = vunpack.c.h.bf16 %v474
    %v938 = vunpack.c.l.bf16 %v475
    %v939 = vunpack.c.h.bf16 %v475
    %v940 = vunpack.c.l.bf16 %v476
    %v941 = vunpack.c.h.bf16 %v476
    %v942 = vunpack.c.l.bf16 %v477
    %v943 = vunpack.c.h.bf16 %v477
    %v944 = vunpack.c.l.bf16 %v478
    %v945 = vunpack.c.h.bf16 %v478
    %v946 = vunpack.c.l.bf16 %v479
    %v947 = vunpack.c.h.bf16 %v479
    %v948 = vunpack.c.l.bf16 %v480
    %v949 = vunpack.c.h.bf16 %v480
    %v950 = vunpack.c.l.bf16 %v481
    %v951 = vunpack.c.h.bf16 %v481
    %v952 = vunpack.c.l.bf16 %v482
    %v953 = vunpack.c.h.bf16 %v482
    %v954 = vunpack.c.l.bf16 %v483
    %v955 = vunpack.c.h.bf16 %v483
    %v956 = vunpack.c.l.bf16 %v484
    %v957 = vunpack.c.h.bf16 %v484
    %v958 = vunpack.c.l.bf16 %v485
    %v959 = vunpack.c.h.bf16 %v485
    %v960 = vunpack.c.l.bf16 %v486
    %v961 = vunpack.c.h.bf16 %v486
    %v962 = vunpack.c.l.bf16 %v487
    %v963 = vunpack.c.h.bf16 %v487
    %v964 = vunpack.c.l.bf16 %v488
    %v965 = vunpack.c.h.bf16 %v488
    %v966 = vunpack.c.l.bf16 %v489
    %v967 = vunpack.c.h.bf16 %v489
    %v968 = vunpack.c.l.bf16 %v490
    %v969 = vunpack.c.h.bf16 %v490
    %v970 = vunpack.c.l.bf16 %v491
    %v971 = vunpack.c.h.bf16 %v491
    %v972 = vunpack.c.l.bf16 %v492
    %v973 = vunpack.c.h.bf16 %v492
    %v974 = vunpack.c.l.bf16 %v493
    %v975 = vunpack.c.h.bf16 %v493
    %v976 = vunpack.c.l.bf16 %v494
    %v977 = vunpack.c.h.bf16 %v494
    %v978 = vunpack.c.l.bf16 %v495
    %v979 = vunpack.c.h.bf16 %v495
    %v980 = vunpack.c.l.bf16 %v496
    %v981 = vunpack.c.h.bf16 %v496
    %v982 = vunpack.c.l.bf16 %v497
    %v983 = vunpack.c.h.bf16 %v497
    %v984 = vunpack.c.l.bf16 %v498
    %v985 = vunpack.c.h.bf16 %v498
    %v986 = vunpack.c.l.bf16 %v499
    %v987 = vunpack.c.h.bf16 %v499
    %v988 = vunpack.c.l.bf16 %v500
    %v989 = vunpack.c.h.bf16 %v500
    %v990 = vunpack.c.l.bf16 %v501
    %v991 = vunpack.c.h.bf16 %v501
    %v992 = vunpack.c.l.bf16 %v502
    %v993 = vunpack.c.h.bf16 %v502
    %v994 = vunpack.c.l.bf16 %v503
    %v995 = vunpack.c.h.bf16 %v503
    %v996 = vunpack.c.l.bf16 %v504
    %v997 = vunpack.c.h.bf16 %v504
    %v998 = vunpack.c.l.bf16 %v505
    %v999 = vunpack.c.h.bf16 %v505
    %v1000 = vunpack.c.l.bf16 %v506
    %v1001 = vunpack.c.h.bf16 %v506
    %v1002 = vunpack.c.l.bf16 %v507
    %v1003 = vunpack.c.h.bf16 %v507
    %v1004 = vunpack.c.l.bf16 %v508
    %v1005 = vunpack.c.h.bf16 %v508
    %v1006 = vunpack.c.l.bf16 %v509
    %v1007 = vunpack.c.h.bf16 %v509
    %v1008 = vunpack.c.l.bf16 %v510
    %v1009 = vunpack.c.h.bf16 %v510
    %v1010 = vunpack.c.l.bf16 %v511
    %v1011 = vunpack.c.h.bf16 %v511
    %v1012 = vunpack.c.l.bf16 %v512
    %v1013 = vunpack.c.h.bf16 %v512
    %v1014 = vunpack.c.l.bf16 %v513
    %v1015 = vunpack.c.h.bf16 %v513
    %v1016 = vunpack.c.l.bf16 %v514
    %v1017 = vunpack.c.h.bf16 %v514
    %v1018 = vunpack.c.l.bf16 %v515
    %v1019 = vunpack.c.h.bf16 %v515
    %v1020 = vunpack.c.l.bf16 %v516
    %v1021 = vunpack.c.h.bf16 %v516
    %v1022 = vunpack.c.l.bf16 %v517
    %v1023 = vunpack.c.h.bf16 %v517
    %v1024 = vunpack.c.l.bf16 %v518
    %v1025 = vunpack.c.h.bf16 %v518
    %v1026 = vunpack.c.l.bf16 %v519
    %v1027 = vunpack.c.h.bf16 %v519
    %v1028 = vunpack.c.l.bf16 %v520
    %v1029 = vunpack.c.h.bf16 %v520
    %v1030 = vunpack.c.l.bf16 %v521
    %v1031 = vunpack.c.h.bf16 %v521
    %v1032 = vunpack.c.l.bf16 %v522
    %v1033 = vunpack.c.h.bf16 %v522
    %v1034 = vunpack.c.l.bf16 %v523
    %v1035 = vunpack.c.h.bf16 %v523
    %v1036 = vld [vmem:[#allocation10] sm:$0xff]
    %v1038 = vlaneseq
    %v1039 = vshrl.u32 %v1038, 7
    %v1040 = vsub.s32 0, %v1039
    %v1041 = vrot.slane %v1036, %v1040
    %v1042 = vlaneseq
    %v1043 = vshrl.u32 %v1042, 7
    %v1044 = vsub.s32 1, %v1043
    %v1045 = vrot.slane %v1036, %v1044
    %v1046 = vlaneseq
    %v1047 = vshrl.u32 %v1046, 7
    %v1048 = vsub.s32 2, %v1047
    %v1049 = vrot.slane %v1036, %v1048
    %v1050 = vlaneseq
    %v1051 = vshrl.u32 %v1050, 7
    %v1052 = vsub.s32 3, %v1051
    %v1053 = vrot.slane %v1036, %v1052
    %v1054 = vlaneseq
    %v1055 = vshrl.u32 %v1054, 7
    %v1056 = vsub.s32 4, %v1055
    %v1057 = vrot.slane %v1036, %v1056
    %v1058 = vlaneseq
    %v1059 = vshrl.u32 %v1058, 7
    %v1060 = vsub.s32 5, %v1059
    %v1061 = vrot.slane %v1036, %v1060
    %v1062 = vlaneseq
    %v1063 = vshrl.u32 %v1062, 7
    %v1064 = vsub.s32 6, %v1063
    %v1065 = vrot.slane %v1036, %v1064
    %v1066 = vlaneseq
    %v1067 = vshrl.u32 %v1066, 7
    %v1068 = vsub.s32 7, %v1067
    %v1069 = vrot.slane %v1036, %v1068
    %1078 = vmatprep.subr.mxu0 %v645
    %1079 = vmatpush1.msra.mxu0 %v644
    %1080 = vmatprep.subr.mxu0 %v637
    %1081 = vmatpush1.msra.mxu0 %v636
    %1082 = vmatprep.subr.mxu0 %v629
    %1083 = vmatpush1.msra.mxu0 %v628
    %1084 = vmatprep.subr.mxu0 %v621
    %1085 = vmatpush1.msra.mxu0 %v620
    %1086 = vmatprep.subr.mxu0 %v613
    %1087 = vmatpush1.msra.mxu0 %v612
    %1088 = vmatprep.subr.mxu0 %v605
    %1089 = vmatpush1.msra.mxu0 %v604
    %1090 = vmatprep.subr.mxu0 %v597
    %1091 = vmatpush1.msra.mxu0 %v596
    %1092 = vmatprep.subr.mxu0 %v589
    %1093 = vmatpush1.msra.mxu0 %v588
    %1094 = vmatprep.subr.mxu0 %v581
    %1095 = vmatpush1.msra.mxu0 %v580
    %1096 = vmatprep.subr.mxu0 %v573
    %1097 = vmatpush1.msra.mxu0 %v572
    %1098 = vmatprep.subr.mxu0 %v565
    %1099 = vmatpush1.msra.mxu0 %v564
    %1100 = vmatprep.subr.mxu0 %v557
    %1101 = vmatpush1.msra.mxu0 %v556
    %1102 = vmatprep.subr.mxu0 %v549
    %1103 = vmatpush1.msra.mxu0 %v548
    %1104 = vmatprep.subr.mxu0 %v541
    %1105 = vmatpush1.msra.mxu0 %v540
    %1106 = vmatprep.subr.mxu0 %v533
    %1107 = vmatpush1.msra.mxu0 %v532
    %1108 = vmatprep.subr.mxu0 %v525
    %1109 = vmatpush1.msra.mxu0 %v524
    %1110 = vmatprep.subr.mxu0 %v773
    %1111 = vmatpush2.msra.mxu0 %v772
    %1112 = vmatprep.subr.mxu0 %v765
    %1113 = vmatpush2.msra.mxu0 %v764
    %1114 = vmatprep.subr.mxu0 %v757
    %1115 = vmatpush2.msra.mxu0 %v756
    %1116 = vmatprep.subr.mxu0 %v749
    %1117 = vmatpush2.msra.mxu0 %v748
    %1118 = vmatprep.subr.mxu0 %v741
    %1119 = vmatpush2.msra.mxu0 %v740
    %1120 = vmatprep.subr.mxu0 %v733
    %1121 = vmatpush2.msra.mxu0 %v732
    %1122 = vmatprep.subr.mxu0 %v725
    %1123 = vmatpush2.msra.mxu0 %v724
    %1124 = vmatprep.subr.mxu0 %v717
    %1125 = vmatpush2.msra.mxu0 %v716
    %1126 = vmatprep.subr.mxu0 %v709
    %1127 = vmatpush2.msra.mxu0 %v708
    %1128 = vmatprep.subr.mxu0 %v701
    %1129 = vmatpush2.msra.mxu0 %v700
    %1130 = vmatprep.subr.mxu0 %v693
    %1131 = vmatpush2.msra.mxu0 %v692
    %1132 = vmatprep.subr.mxu0 %v685
    %1133 = vmatpush2.msra.mxu0 %v684
    %1134 = vmatprep.subr.mxu0 %v677
    %1135 = vmatpush2.msra.mxu0 %v676
    %1136 = vmatprep.subr.mxu0 %v669
    %1137 = vmatpush2.msra.mxu0 %v668
    %1138 = vmatprep.subr.mxu0 %v661
    %1139 = vmatpush2.msra.mxu0 %v660
    %1140 = vmatprep.subr.mxu0 %v653
    %1141 = vmatpush2.msra.mxu0 %v652
    %1142 = vmatprep.mubr.f32.mxu0 %v265
    %1143 = vmatmul.mubr.f32.gmra.mxu0 %v264
    %v1144 = vpop.f32.mrf.mxu0
    %v1145 = vadd.f32 %v1041, %v1144
    %v1146 = vpop.f32.mrf.mxu0
    %v1147 = vadd.f32 %v1045, %v1146
    %1148 = vdwg.mxu0
    %1149 = vmatprep.subr.mxu0 %v901
    %1150 = vmatpush1.msra.mxu0 %v900
    %1151 = vmatprep.subr.mxu0 %v893
    %1152 = vmatpush1.msra.mxu0 %v892
    %1153 = vmatprep.subr.mxu0 %v885
    %1154 = vmatpush1.msra.mxu0 %v884
    %1155 = vmatprep.subr.mxu0 %v877
    %1156 = vmatpush1.msra.mxu0 %v876
    %1157 = vmatprep.subr.mxu0 %v869
    %1158 = vmatpush1.msra.mxu0 %v868
    %1159 = vmatprep.subr.mxu0 %v861
    %1160 = vmatpush1.msra.mxu0 %v860
    %1161 = vmatprep.subr.mxu0 %v853
    %1162 = vmatpush1.msra.mxu0 %v852
    %1163 = vmatprep.subr.mxu0 %v845
    %1164 = vmatpush1.msra.mxu0 %v844
    %1165 = vmatprep.subr.mxu0 %v837
    %1166 = vmatpush1.msra.mxu0 %v836
    %1167 = vmatprep.subr.mxu0 %v829
    %1168 = vmatpush1.msra.mxu0 %v828
    %1169 = vmatprep.subr.mxu0 %v821
    %1170 = vmatpush1.msra.mxu0 %v820
    %1171 = vmatprep.subr.mxu0 %v813
    %1172 = vmatpush1.msra.mxu0 %v812
    %1173 = vmatprep.subr.mxu0 %v805
    %1174 = vmatpush1.msra.mxu0 %v804
    %1175 = vmatprep.subr.mxu0 %v797
    %1176 = vmatpush1.msra.mxu0 %v796
    %1177 = vmatprep.subr.mxu0 %v789
    %1178 = vmatpush1.msra.mxu0 %v788
    %1179 = vmatprep.subr.mxu0 %v781
    %1180 = vmatpush1.msra.mxu0 %v780
    %1181 = vmatprep.subr.mxu0 %v1029
    %1182 = vmatpush2.msra.mxu0 %v1028
    %1183 = vmatprep.subr.mxu0 %v1021
    %1184 = vmatpush2.msra.mxu0 %v1020
    %1185 = vmatprep.subr.mxu0 %v1013
    %1186 = vmatpush2.msra.mxu0 %v1012
    %1187 = vmatprep.subr.mxu0 %v1005
    %1188 = vmatpush2.msra.mxu0 %v1004
    %1189 = vmatprep.subr.mxu0 %v997
    %1190 = vmatpush2.msra.mxu0 %v996
    %1191 = vmatprep.subr.mxu0 %v989
    %1192 = vmatpush2.msra.mxu0 %v988
    %1193 = vmatprep.subr.mxu0 %v981
    %1194 = vmatpush2.msra.mxu0 %v980
    %1195 = vmatprep.subr.mxu0 %v973
    %1196 = vmatpush2.msra.mxu0 %v972
    %1197 = vmatprep.subr.mxu0 %v965
    %1198 = vmatpush2.msra.mxu0 %v964
    %1199 = vmatprep.subr.mxu0 %v957
    %1200 = vmatpush2.msra.mxu0 %v956
    %1201 = vmatprep.subr.mxu0 %v949
    %1202 = vmatpush2.msra.mxu0 %v948
    %1203 = vmatprep.subr.mxu0 %v941
    %1204 = vmatpush2.msra.mxu0 %v940
    %1205 = vmatprep.subr.mxu0 %v933
    %1206 = vmatpush2.msra.mxu0 %v932
    %1207 = vmatprep.subr.mxu0 %v925
    %1208 = vmatpush2.msra.mxu0 %v924
    %1209 = vmatprep.subr.mxu0 %v917
    %1210 = vmatpush2.msra.mxu0 %v916
    %1211 = vmatprep.subr.mxu0 %v909
    %1212 = vmatpush2.msra.mxu0 %v908
    %1213 = vmatprep.mubr.f32.mxu0 %v267
    %1214 = vmatmul.mubr.f32.gmra.mxu0 %v266
    %v1215 = vpop.f32.mrf.mxu0
    %v1216 = vadd.f32 %v1145, %v1215
    %v1217 = vpop.f32.mrf.mxu0
    %v1218 = vadd.f32 %v1147, %v1217
    %1219 = vdwg.mxu0
    %1220 = vmatprep.subr.mxu0 %v647
    %1221 = vmatpush1.msra.mxu0 %v646
    %1222 = vmatprep.subr.mxu0 %v639
    %1223 = vmatpush1.msra.mxu0 %v638
    %1224 = vmatprep.subr.mxu0 %v631
    %1225 = vmatpush1.msra.mxu0 %v630
    %1226 = vmatprep.subr.mxu0 %v623
    %1227 = vmatpush1.msra.mxu0 %v622
    %1228 = vmatprep.subr.mxu0 %v615
    %1229 = vmatpush1.msra.mxu0 %v614
    %1230 = vmatprep.subr.mxu0 %v607
    %1231 = vmatpush1.msra.mxu0 %v606
    %1232 = vmatprep.subr.mxu0 %v599
    %1233 = vmatpush1.msra.mxu0 %v598
    %1234 = vmatprep.subr.mxu0 %v591
    %1235 = vmatpush1.msra.mxu0 %v590
    %1236 = vmatprep.subr.mxu0 %v583
    %1237 = vmatpush1.msra.mxu0 %v582
    %1238 = vmatprep.subr.mxu0 %v575
    %1239 = vmatpush1.msra.mxu0 %v574
    %1240 = vmatprep.subr.mxu0 %v567
    %1241 = vmatpush1.msra.mxu0 %v566
    %1242 = vmatprep.subr.mxu0 %v559
    %1243 = vmatpush1.msra.mxu0 %v558
    %1244 = vmatprep.subr.mxu0 %v551
    %1245 = vmatpush1.msra.mxu0 %v550
    %1246 = vmatprep.subr.mxu0 %v543
    %1247 = vmatpush1.msra.mxu0 %v542
    %1248 = vmatprep.subr.mxu0 %v535
    %1249 = vmatpush1.msra.mxu0 %v534
    %1250 = vmatprep.subr.mxu0 %v527
    %1251 = vmatpush1.msra.mxu0 %v526
    %1252 = vmatprep.subr.mxu0 %v775
    %1253 = vmatpush2.msra.mxu0 %v774
    %1254 = vmatprep.subr.mxu0 %v767
    %1255 = vmatpush2.msra.mxu0 %v766
    %1256 = vmatprep.subr.mxu0 %v759
    %1257 = vmatpush2.msra.mxu0 %v758
    %1258 = vmatprep.subr.mxu0 %v751
    %1259 = vmatpush2.msra.mxu0 %v750
    %1260 = vmatprep.subr.mxu0 %v743
    %1261 = vmatpush2.msra.mxu0 %v742
    %1262 = vmatprep.subr.mxu0 %v735
    %1263 = vmatpush2.msra.mxu0 %v734
    %1264 = vmatprep.subr.mxu0 %v727
    %1265 = vmatpush2.msra.mxu0 %v726
    %1266 = vmatprep.subr.mxu0 %v719
    %1267 = vmatpush2.msra.mxu0 %v718
    %1268 = vmatprep.subr.mxu0 %v711
    %1269 = vmatpush2.msra.mxu0 %v710
    %1270 = vmatprep.subr.mxu0 %v703
    %1271 = vmatpush2.msra.mxu0 %v702
    %1272 = vmatprep.subr.mxu0 %v695
    %1273 = vmatpush2.msra.mxu0 %v694
    %1274 = vmatprep.subr.mxu0 %v687
    %1275 = vmatpush2.msra.mxu0 %v686
    %1276 = vmatprep.subr.mxu0 %v679
    %1277 = vmatpush2.msra.mxu0 %v678
    %1278 = vmatprep.subr.mxu0 %v671
    %1279 = vmatpush2.msra.mxu0 %v670
    %1280 = vmatprep.subr.mxu0 %v663
    %1281 = vmatpush2.msra.mxu0 %v662
    %1282 = vmatprep.subr.mxu0 %v655
    %1283 = vmatpush2.msra.mxu0 %v654
    %1284 = vmatprep.mubr.f32.mxu0 %v265
    %1285 = vmatmul.mubr.f32.gmra.mxu0 %v264
    %v1286 = vpop.f32.mrf.mxu0
    %v1287 = vadd.f32 %v1049, %v1286
    %v1288 = vpop.f32.mrf.mxu0
    %v1289 = vadd.f32 %v1053, %v1288
    %1290 = vdwg.mxu0
    %1291 = vmatprep.subr.mxu0 %v903
    %1292 = vmatpush1.msra.mxu0 %v902
    %1293 = vmatprep.subr.mxu0 %v895
    %1294 = vmatpush1.msra.mxu0 %v894
    %1295 = vmatprep.subr.mxu0 %v887
    %1296 = vmatpush1.msra.mxu0 %v886
    %1297 = vmatprep.subr.mxu0 %v879
    %1298 = vmatpush1.msra.mxu0 %v878
    %1299 = vmatprep.subr.mxu0 %v871
    %1300 = vmatpush1.msra.mxu0 %v870
    %1301 = vmatprep.subr.mxu0 %v863
    %1302 = vmatpush1.msra.mxu0 %v862
    %1303 = vmatprep.subr.mxu0 %v855
    %1304 = vmatpush1.msra.mxu0 %v854
    %1305 = vmatprep.subr.mxu0 %v847
    %1306 = vmatpush1.msra.mxu0 %v846
    %1307 = vmatprep.subr.mxu0 %v839
    %1308 = vmatpush1.msra.mxu0 %v838
    %1309 = vmatprep.subr.mxu0 %v831
    %1310 = vmatpush1.msra.mxu0 %v830
    %1311 = vmatprep.subr.mxu0 %v823
    %1312 = vmatpush1.msra.mxu0 %v822
    %1313 = vmatprep.subr.mxu0 %v815
    %1314 = vmatpush1.msra.mxu0 %v814
    %1315 = vmatprep.subr.mxu0 %v807
    %1316 = vmatpush1.msra.mxu0 %v806
    %1317 = vmatprep.subr.mxu0 %v799
    %1318 = vmatpush1.msra.mxu0 %v798
    %1319 = vmatprep.subr.mxu0 %v791
    %1320 = vmatpush1.msra.mxu0 %v790
    %1321 = vmatprep.subr.mxu0 %v783
    %1322 = vmatpush1.msra.mxu0 %v782
    %1323 = vmatprep.subr.mxu0 %v1031
    %1324 = vmatpush2.msra.mxu0 %v1030
    %1325 = vmatprep.subr.mxu0 %v1023
    %1326 = vmatpush2.msra.mxu0 %v1022
    %1327 = vmatprep.subr.mxu0 %v1015
    %1328 = vmatpush2.msra.mxu0 %v1014
    %1329 = vmatprep.subr.mxu0 %v1007
    %1330 = vmatpush2.msra.mxu0 %v1006
    %1331 = vmatprep.subr.mxu0 %v999
    %1332 = vmatpush2.msra.mxu0 %v998
    %1333 = vmatprep.subr.mxu0 %v991
    %1334 = vmatpush2.msra.mxu0 %v990
    %1335 = vmatprep.subr.mxu0 %v983
    %1336 = vmatpush2.msra.mxu0 %v982
    %1337 = vmatprep.subr.mxu0 %v975
    %1338 = vmatpush2.msra.mxu0 %v974
    %1339 = vmatprep.subr.mxu0 %v967
    %1340 = vmatpush2.msra.mxu0 %v966
    %1341 = vmatprep.subr.mxu0 %v959
    %1342 = vmatpush2.msra.mxu0 %v958
    %1343 = vmatprep.subr.mxu0 %v951
    %1344 = vmatpush2.msra.mxu0 %v950
    %1345 = vmatprep.subr.mxu0 %v943
    %1346 = vmatpush2.msra.mxu0 %v942
    %1347 = vmatprep.subr.mxu0 %v935
    %1348 = vmatpush2.msra.mxu0 %v934
    %1349 = vmatprep.subr.mxu0 %v927
    %1350 = vmatpush2.msra.mxu0 %v926
    %1351 = vmatprep.subr.mxu0 %v919
    %1352 = vmatpush2.msra.mxu0 %v918
    %1353 = vmatprep.subr.mxu0 %v911
    %1354 = vmatpush2.msra.mxu0 %v910
    %1355 = vmatprep.mubr.f32.mxu0 %v267
    %1356 = vmatmul.mubr.f32.gmra.mxu0 %v266
    %v1357 = vpop.f32.mrf.mxu0
    %v1358 = vadd.f32 %v1287, %v1357
    %v1359 = vpop.f32.mrf.mxu0
    %v1360 = vadd.f32 %v1289, %v1359
    %1361 = vdwg.mxu0
    %1362 = vmatprep.subr.mxu0 %v649
    %1363 = vmatpush1.msra.mxu0 %v648
    %1364 = vmatprep.subr.mxu0 %v641
    %1365 = vmatpush1.msra.mxu0 %v640
    %1366 = vmatprep.subr.mxu0 %v633
    %1367 = vmatpush1.msra.mxu0 %v632
    %1368 = vmatprep.subr.mxu0 %v625
    %1369 = vmatpush1.msra.mxu0 %v624
    %1370 = vmatprep.subr.mxu0 %v617
    %1371 = vmatpush1.msra.mxu0 %v616
    %1372 = vmatprep.subr.mxu0 %v609
    %1373 = vmatpush1.msra.mxu0 %v608
    %1374 = vmatprep.subr.mxu0 %v601
    %1375 = vmatpush1.msra.mxu0 %v600
    %1376 = vmatprep.subr.mxu0 %v593
    %1377 = vmatpush1.msra.mxu0 %v592
    %1378 = vmatprep.subr.mxu0 %v585
    %1379 = vmatpush1.msra.mxu0 %v584
    %1380 = vmatprep.subr.mxu0 %v577
    %1381 = vmatpush1.msra.mxu0 %v576
    %1382 = vmatprep.subr.mxu0 %v569
    %1383 = vmatpush1.msra.mxu0 %v568
    %1384 = vmatprep.subr.mxu0 %v561
    %1385 = vmatpush1.msra.mxu0 %v560
    %1386 = vmatprep.subr.mxu0 %v553
    %1387 = vmatpush1.msra.mxu0 %v552
    %1388 = vmatprep.subr.mxu0 %v545
    %1389 = vmatpush1.msra.mxu0 %v544
    %1390 = vmatprep.subr.mxu0 %v537
    %1391 = vmatpush1.msra.mxu0 %v536
    %1392 = vmatprep.subr.mxu0 %v529
    %1393 = vmatpush1.msra.mxu0 %v528
    %1394 = vmatprep.subr.mxu0 %v777
    %1395 = vmatpush2.msra.mxu0 %v776
    %1396 = vmatprep.subr.mxu0 %v769
    %1397 = vmatpush2.msra.mxu0 %v768
    %1398 = vmatprep.subr.mxu0 %v761
    %1399 = vmatpush2.msra.mxu0 %v760
    %1400 = vmatprep.subr.mxu0 %v753
    %1401 = vmatpush2.msra.mxu0 %v752
    %1402 = vmatprep.subr.mxu0 %v745
    %1403 = vmatpush2.msra.mxu0 %v744
    %1404 = vmatprep.subr.mxu0 %v737
    %1405 = vmatpush2.msra.mxu0 %v736
    %1406 = vmatprep.subr.mxu0 %v729
    %1407 = vmatpush2.msra.mxu0 %v728
    %1408 = vmatprep.subr.mxu0 %v721
    %1409 = vmatpush2.msra.mxu0 %v720
    %1410 = vmatprep.subr.mxu0 %v713
    %1411 = vmatpush2.msra.mxu0 %v712
    %1412 = vmatprep.subr.mxu0 %v705
    %1413 = vmatpush2.msra.mxu0 %v704
    %1414 = vmatprep.subr.mxu0 %v697
    %1415 = vmatpush2.msra.mxu0 %v696
    %1416 = vmatprep.subr.mxu0 %v689
    %1417 = vmatpush2.msra.mxu0 %v688
    %1418 = vmatprep.subr.mxu0 %v681
    %1419 = vmatpush2.msra.mxu0 %v680
    %1420 = vmatprep.subr.mxu0 %v673
    %1421 = vmatpush2.msra.mxu0 %v672
    %1422 = vmatprep.subr.mxu0 %v665
    %1423 = vmatpush2.msra.mxu0 %v664
    %1424 = vmatprep.subr.mxu0 %v657
    %1425 = vmatpush2.msra.mxu0 %v656
    %1426 = vmatprep.mubr.f32.mxu0 %v265
    %1427 = vmatmul.mubr.f32.gmra.mxu0 %v264
    %v1428 = vpop.f32.mrf.mxu0
    %v1429 = vadd.f32 %v1057, %v1428
    %v1430 = vpop.f32.mrf.mxu0
    %v1431 = vadd.f32 %v1061, %v1430
    %1432 = vdwg.mxu0
    %1433 = vmatprep.subr.mxu0 %v905
    %1434 = vmatpush1.msra.mxu0 %v904
    %1435 = vmatprep.subr.mxu0 %v897
    %1436 = vmatpush1.msra.mxu0 %v896
    %1437 = vmatprep.subr.mxu0 %v889
    %1438 = vmatpush1.msra.mxu0 %v888
    %1439 = vmatprep.subr.mxu0 %v881
    %1440 = vmatpush1.msra.mxu0 %v880
    %1441 = vmatprep.subr.mxu0 %v873
    %1442 = vmatpush1.msra.mxu0 %v872
    %1443 = vmatprep.subr.mxu0 %v865
    %1444 = vmatpush1.msra.mxu0 %v864
    %1445 = vmatprep.subr.mxu0 %v857
    %1446 = vmatpush1.msra.mxu0 %v856
    %1447 = vmatprep.subr.mxu0 %v849
    %1448 = vmatpush1.msra.mxu0 %v848
    %1449 = vmatprep.subr.mxu0 %v841
    %1450 = vmatpush1.msra.mxu0 %v840
    %1451 = vmatprep.subr.mxu0 %v833
    %1452 = vmatpush1.msra.mxu0 %v832
    %1453 = vmatprep.subr.mxu0 %v825
    %1454 = vmatpush1.msra.mxu0 %v824
    %1455 = vmatprep.subr.mxu0 %v817
    %1456 = vmatpush1.msra.mxu0 %v816
    %1457 = vmatprep.subr.mxu0 %v809
    %1458 = vmatpush1.msra.mxu0 %v808
    %1459 = vmatprep.subr.mxu0 %v801
    %1460 = vmatpush1.msra.mxu0 %v800
    %1461 = vmatprep.subr.mxu0 %v793
    %1462 = vmatpush1.msra.mxu0 %v792
    %1463 = vmatprep.subr.mxu0 %v785
    %1464 = vmatpush1.msra.mxu0 %v784
    %1465 = vmatprep.subr.mxu0 %v1033
    %1466 = vmatpush2.msra.mxu0 %v1032
    %1467 = vmatprep.subr.mxu0 %v1025
    %1468 = vmatpush2.msra.mxu0 %v1024
    %1469 = vmatprep.subr.mxu0 %v1017
    %1470 = vmatpush2.msra.mxu0 %v1016
    %1471 = vmatprep.subr.mxu0 %v1009
    %1472 = vmatpush2.msra.mxu0 %v1008
    %1473 = vmatprep.subr.mxu0 %v1001
    %1474 = vmatpush2.msra.mxu0 %v1000
    %1475 = vmatprep.subr.mxu0 %v993
    %1476 = vmatpush2.msra.mxu0 %v992
    %1477 = vmatprep.subr.mxu0 %v985
    %1478 = vmatpush2.msra.mxu0 %v984
    %1479 = vmatprep.subr.mxu0 %v977
    %1480 = vmatpush2.msra.mxu0 %v976
    %1481 = vmatprep.subr.mxu0 %v969
    %1482 = vmatpush2.msra.mxu0 %v968
    %1483 = vmatprep.subr.mxu0 %v961
    %1484 = vmatpush2.msra.mxu0 %v960
    %1485 = vmatprep.subr.mxu0 %v953
    %1486 = vmatpush2.msra.mxu0 %v952
    %1487 = vmatprep.subr.mxu0 %v945
    %1488 = vmatpush2.msra.mxu0 %v944
    %1489 = vmatprep.subr.mxu0 %v937
    %1490 = vmatpush2.msra.mxu0 %v936
    %1491 = vmatprep.subr.mxu0 %v929
    %1492 = vmatpush2.msra.mxu0 %v928
    %1493 = vmatprep.subr.mxu0 %v921
    %1494 = vmatpush2.msra.mxu0 %v920
    %1495 = vmatprep.subr.mxu0 %v913
    %1496 = vmatpush2.msra.mxu0 %v912
    %1497 = vmatprep.mubr.f32.mxu0 %v267
    %1498 = vmatmul.mubr.f32.gmra.mxu0 %v266
    %v1499 = vpop.f32.mrf.mxu0
    %v1500 = vadd.f32 %v1429, %v1499
    %v1501 = vpop.f32.mrf.mxu0
    %v1502 = vadd.f32 %v1431, %v1501
    %1503 = vdwg.mxu0
    %1504 = vmatprep.subr.mxu0 %v651
    %1505 = vmatpush1.msra.mxu0 %v650
    %1506 = vmatprep.subr.mxu0 %v643
    %1507 = vmatpush1.msra.mxu0 %v642
    %1508 = vmatprep.subr.mxu0 %v635
    %1509 = vmatpush1.msra.mxu0 %v634
    %1510 = vmatprep.subr.mxu0 %v627
    %1511 = vmatpush1.msra.mxu0 %v626
    %1512 = vmatprep.subr.mxu0 %v619
    %1513 = vmatpush1.msra.mxu0 %v618
    %1514 = vmatprep.subr.mxu0 %v611
    %1515 = vmatpush1.msra.mxu0 %v610
    %1516 = vmatprep.subr.mxu0 %v603
    %1517 = vmatpush1.msra.mxu0 %v602
    %1518 = vmatprep.subr.mxu0 %v595
    %1519 = vmatpush1.msra.mxu0 %v594
    %1520 = vmatprep.subr.mxu0 %v587
    %1521 = vmatpush1.msra.mxu0 %v586
    %1522 = vmatprep.subr.mxu0 %v579
    %1523 = vmatpush1.msra.mxu0 %v578
    %1524 = vmatprep.subr.mxu0 %v571
    %1525 = vmatpush1.msra.mxu0 %v570
    %1526 = vmatprep.subr.mxu0 %v563
    %1527 = vmatpush1.msra.mxu0 %v562
    %1528 = vmatprep.subr.mxu0 %v555
    %1529 = vmatpush1.msra.mxu0 %v554
    %1530 = vmatprep.subr.mxu0 %v547
    %1531 = vmatpush1.msra.mxu0 %v546
    %1532 = vmatprep.subr.mxu0 %v539
    %1533 = vmatpush1.msra.mxu0 %v538
    %1534 = vmatprep.subr.mxu0 %v531
    %1535 = vmatpush1.msra.mxu0 %v530
    %1536 = vmatprep.subr.mxu0 %v779
    %1537 = vmatpush2.msra.mxu0 %v778
    %1538 = vmatprep.subr.mxu0 %v771
    %1539 = vmatpush2.msra.mxu0 %v770
    %1540 = vmatprep.subr.mxu0 %v763
    %1541 = vmatpush2.msra.mxu0 %v762
    %1542 = vmatprep.subr.mxu0 %v755
    %1543 = vmatpush2.msra.mxu0 %v754
    %1544 = vmatprep.subr.mxu0 %v747
    %1545 = vmatpush2.msra.mxu0 %v746
    %1546 = vmatprep.subr.mxu0 %v739
    %1547 = vmatpush2.msra.mxu0 %v738
    %1548 = vmatprep.subr.mxu0 %v731
    %1549 = vmatpush2.msra.mxu0 %v730
    %1550 = vmatprep.subr.mxu0 %v723
    %1551 = vmatpush2.msra.mxu0 %v722
    %1552 = vmatprep.subr.mxu0 %v715
    %1553 = vmatpush2.msra.mxu0 %v714
    %1554 = vmatprep.subr.mxu0 %v707
    %1555 = vmatpush2.msra.mxu0 %v706
    %1556 = vmatprep.subr.mxu0 %v699
    %1557 = vmatpush2.msra.mxu0 %v698
    %1558 = vmatprep.subr.mxu0 %v691
    %1559 = vmatpush2.msra.mxu0 %v690
    %1560 = vmatprep.subr.mxu0 %v683
    %1561 = vmatpush2.msra.mxu0 %v682
    %1562 = vmatprep.subr.mxu0 %v675
    %1563 = vmatpush2.msra.mxu0 %v674
    %1564 = vmatprep.subr.mxu0 %v667
    %1565 = vmatpush2.msra.mxu0 %v666
    %1566 = vmatprep.subr.mxu0 %v659
    %1567 = vmatpush2.msra.mxu0 %v658
    %1568 = vmatprep.mubr.f32.mxu0 %v265
    %1569 = vmatmul.mubr.f32.gmra.mxu0 %v264
    %v1570 = vpop.f32.mrf.mxu0
    %v1571 = vadd.f32 %v1065, %v1570
    %v1572 = vpop.f32.mrf.mxu0
    %v1573 = vadd.f32 %v1069, %v1572
    %1574 = vdwg.mxu0
    %1575 = vmatprep.subr.mxu0 %v907
    %1576 = vmatpush1.msra.mxu0 %v906
    %1577 = vmatprep.subr.mxu0 %v899
    %1578 = vmatpush1.msra.mxu0 %v898
    %1579 = vmatprep.subr.mxu0 %v891
    %1580 = vmatpush1.msra.mxu0 %v890
    %1581 = vmatprep.subr.mxu0 %v883
    %1582 = vmatpush1.msra.mxu0 %v882
    %1583 = vmatprep.subr.mxu0 %v875
    %1584 = vmatpush1.msra.mxu0 %v874
    %1585 = vmatprep.subr.mxu0 %v867
    %1586 = vmatpush1.msra.mxu0 %v866
    %1587 = vmatprep.subr.mxu0 %v859
    %1588 = vmatpush1.msra.mxu0 %v858
    %1589 = vmatprep.subr.mxu0 %v851
    %1590 = vmatpush1.msra.mxu0 %v850
    %1591 = vmatprep.subr.mxu0 %v843
    %1592 = vmatpush1.msra.mxu0 %v842
    %1593 = vmatprep.subr.mxu0 %v835
    %1594 = vmatpush1.msra.mxu0 %v834
    %1595 = vmatprep.subr.mxu0 %v827
    %1596 = vmatpush1.msra.mxu0 %v826
    %1597 = vmatprep.subr.mxu0 %v819
    %1598 = vmatpush1.msra.mxu0 %v818
    %1599 = vmatprep.subr.mxu0 %v811
    %1600 = vmatpush1.msra.mxu0 %v810
    %1601 = vmatprep.subr.mxu0 %v803
    %1602 = vmatpush1.msra.mxu0 %v802
    %1603 = vmatprep.subr.mxu0 %v795
    %1604 = vmatpush1.msra.mxu0 %v794
    %1605 = vmatprep.subr.mxu0 %v787
    %1606 = vmatpush1.msra.mxu0 %v786
    %1607 = vmatprep.subr.mxu0 %v1035
    %1608 = vmatpush2.msra.mxu0 %v1034
    %1609 = vmatprep.subr.mxu0 %v1027
    %1610 = vmatpush2.msra.mxu0 %v1026
    %1611 = vmatprep.subr.mxu0 %v1019
    %1612 = vmatpush2.msra.mxu0 %v1018
    %1613 = vmatprep.subr.mxu0 %v1011
    %1614 = vmatpush2.msra.mxu0 %v1010
    %1615 = vmatprep.subr.mxu0 %v1003
    %1616 = vmatpush2.msra.mxu0 %v1002
    %1617 = vmatprep.subr.mxu0 %v995
    %1618 = vmatpush2.msra.mxu0 %v994
    %1619 = vmatprep.subr.mxu0 %v987
    %1620 = vmatpush2.msra.mxu0 %v986
    %1621 = vmatprep.subr.mxu0 %v979
    %1622 = vmatpush2.msra.mxu0 %v978
    %1623 = vmatprep.subr.mxu0 %v971
    %1624 = vmatpush2.msra.mxu0 %v970
    %1625 = vmatprep.subr.mxu0 %v963
    %1626 = vmatpush2.msra.mxu0 %v962
    %1627 = vmatprep.subr.mxu0 %v955
    %1628 = vmatpush2.msra.mxu0 %v954
    %1629 = vmatprep.subr.mxu0 %v947
    %1630 = vmatpush2.msra.mxu0 %v946
    %1631 = vmatprep.subr.mxu0 %v939
    %1632 = vmatpush2.msra.mxu0 %v938
    %1633 = vmatprep.subr.mxu0 %v931
    %1634 = vmatpush2.msra.mxu0 %v930
    %1635 = vmatprep.subr.mxu0 %v923
    %1636 = vmatpush2.msra.mxu0 %v922
    %1637 = vmatprep.subr.mxu0 %v915
    %1638 = vmatpush2.msra.mxu0 %v914
    %1639 = vmatprep.mubr.f32.mxu0 %v267
    %1640 = vmatmul.mubr.f32.gmra.mxu0 %v266
    %v1641 = vpop.f32.mrf.mxu0
    %v1642 = vadd.f32 %v1571, %v1641
    %v1643 = vpop.f32.mrf.mxu0
    %v1644 = vadd.f32 %v1573, %v1643
    %1645 = vdwg.mxu0
    %v1646 = vmax.f32 %v1216, 0.0
    %v1647 = vmax.f32 %v1218, 0.0
    %v1648 = vmax.f32 %v1358, 0.0
    %v1649 = vmax.f32 %v1360, 0.0
    %v1650 = vmax.f32 %v1500, 0.0
    %v1651 = vmax.f32 %v1502, 0.0
    %v1652 = vmax.f32 %v1642, 0.0
    %v1653 = vmax.f32 %v1644, 0.0
    %1654 = vst [vmem:[#allocation11] sm:$0xff] %v1646
    %1655 = vst [vmem:[#allocation11 + $0x8] sm:$0xff] %v1647
    %1656 = vst [vmem:[#allocation11 + $0x10] sm:$0xff] %v1648
    %1657 = vst [vmem:[#allocation11 + $0x18] sm:$0xff] %v1649
    %1658 = vst [vmem:[#allocation11 + $0x20] sm:$0xff] %v1650
    %1659 = vst [vmem:[#allocation11 + $0x28] sm:$0xff] %v1651
    %1660 = vst [vmem:[#allocation11 + $0x30] sm:$0xff] %v1652
    %1661 = vst [vmem:[#allocation11 + $0x38] sm:$0xff] %v1653
    // Predicated region
    $region42: #{hand_encoder_forward.1} parent=1 // pred_check
      _
    $region43: #{hand_encoder_forward.1} parent=1 // pred_check_branch
      %1663 = sbr.rel (0) target = $region45
    $region44: #{hand_encoder_forward.1} parent=1 // pred_region
      %s1665 = ssub.s32 1024, 1024
      %1666 = vsyncadd [#allocation4], %s1665
      %s1668 = sshll.u32 [#allocation11], 4
      %s1669 = int_to_ptr.vmem [resolvable:$true] %s1668
      %1671 = dma.vmem_to_hbm [thread:$0]  %s1669, 1024, %s5, [#allocation4]
    $region45: #{hand_encoder_forward.1} parent=1 // pred_fallthru
      _
    // Predicated region
    $region46: #{hand_encoder_forward.1} parent=1 // pred_check
      _
    $region47: #{hand_encoder_forward.1} parent=1 // pred_check_branch
      %1673 = sbr.rel (0) target = $region49
    $region48: #{hand_encoder_forward.1} parent=1 // pred_region
      %1674 = dma.done [#allocation4], 1024
    $region49: #{hand_encoder_forward.1} parent=1 // pred_fallthru
      _
    %1675 = vsyncpa [#allocation3], 1
    %1676 = vsyncpa [#allocation6], 1
    %1677 = vsyncpa [#allocation9], 1
    %1678 = vsyncpa [#allocation4], 1

</llo_original>
